<compile_context>
chip_gen: v6e
topology: v6e:2x2x1
jax: 0.10.0
libtpu: 0.0.40
codegen_flags: <defaults>
</compile_context>

<pallas_src>
import jax
import jax.numpy as jnp
from jax.experimental import pallas as pl
from jax.experimental.pallas import tpu as pltpu


def moe_classifier_kernel(xc_ref, xf_ref, xm_ref, w_ref, b_ref, o_ref):
    # Embedding tiles: (TB, D).  Weight: (3, D) resident.  Bias: (1, 1) SMEM.
    xc = xc_ref[...].astype(jnp.float32)
    xf = xf_ref[...].astype(jnp.float32)
    xm = xm_ref[...].astype(jnp.float32)

    w = w_ref[...].astype(jnp.float32)        # (3, D), lane-dense
    wc = w[0:1, :]                            # (1, D) -> sublane-broadcast
    wf = w[1:2, :]
    wm = w[2:3, :]

    # VPU multiply-accumulate (no MXU), then XLU lane reduce over features.
    s = xc * wc + xf * wf + xm * wm           # (TB, D)
    acc = jnp.sum(s, axis=-1, keepdims=True)  # (TB, 1), f32
    acc = acc + b_ref[0, 0]

    o_ref[...] = jax.nn.sigmoid(acc).astype(o_ref.dtype)


def moe_forward(emb_conv, emb_fb, emb_ms, weight, bias, *, max_block_rows=512):
    """sigmoid(cat([emb_conv, emb_fb, emb_ms], 1) @ weight.T + bias) -> [B, 1].

    weight: [1, 3*D]  (PyTorch nn.Linear(3*D, 1) layout)
    bias:   scalar.
    Embeddings may be float32 or bfloat16; accumulation is float32.
    """
    B, D = emb_conv.shape
    assert emb_fb.shape == (B, D) and emb_ms.shape == (B, D)
    assert weight.shape == (1, 3 * D)

    # Single lane-dense resident weight block: row k is the slice for stream k.
    w3 = weight.reshape(3, D)
    b2 = jnp.asarray(bias, jnp.float32).reshape(1, 1)

    # Batch tile: full batch if small, otherwise 512 rows (divisible by 8;
    # a partial trailing block is handled by Pallas padding/masking).
    tb = B if B <= max_block_rows else max_block_rows
    grid = (pl.cdiv(B, tb),)

    emb_spec = pl.BlockSpec((tb, D), lambda i: (i, 0))
    w_spec = pl.BlockSpec((3, D), lambda i: (0, 0))      # resident across steps
    out_spec = pl.BlockSpec((tb, 1), lambda i: (i, 0))

    return pl.pallas_call(
        moe_classifier_kernel,
        out_shape=jax.ShapeDtypeStruct((B, 1), jnp.float32),
        grid_spec=pltpu.PrefetchScalarGridSpec(
            num_scalar_prefetch=0,
            grid=grid,
            in_specs=[
                emb_spec, emb_spec, emb_spec,            # 3 embedding streams
                w_spec,                                  # classifier weight
                pl.BlockSpec(memory_space=pltpu.SMEM),   # bias (1, 1)
            ],
            out_specs=out_spec,
        ),
        compiler_params=pltpu.CompilerParams(
            dimension_semantics=("parallel",),
        ),
    )(emb_conv, emb_fb, emb_ms, w3, b2)


if __name__ == "__main__":
    # Small deterministic shapes: per-stream embedding dim D = 128, so the
    # classifier sees 3*D = 384 features; batch 1024 exercises the row tiling
    # (two grid steps of 512 rows).
    B, D = 1024, 128
    key = jax.random.PRNGKey(0)
    k1, k2, k3, kw, kb = jax.random.split(key, 5)

    emb_conv = jax.random.normal(k1, (B, D), jnp.float32)
    emb_fb = jax.random.normal(k2, (B, D), jnp.float32)
    emb_ms = jax.random.normal(k3, (B, D), jnp.float32)

    # nn.Linear(3*D, 1): weight [1, 3*D], bias scalar.
    bound = 1.0 / jnp.sqrt(3.0 * D)
    weight = jax.random.uniform(kw, (1, 3 * D), jnp.float32, -bound, bound)
    bias = jax.random.uniform(kb, (), jnp.float32, -bound, bound)

    out = moe_forward(emb_conv, emb_fb, emb_ms, weight, bias)
    out = jax.block_until_ready(out)

    # Pure-JAX reference (exactly the PyTorch forward).
    combined = jnp.concatenate([emb_conv, emb_fb, emb_ms], axis=1)
    ref = jax.nn.sigmoid(combined @ weight.T + bias)

    assert out.shape == (B, 1)
    assert jnp.allclose(out, ref, atol=1e-5, rtol=1e-5)

    print("KERNEL_OK")
</pallas_src>

<mosaic_0001>
module attributes {stable_mosaic.version = 11 : i64} {
  func.func @moe_classifier_kernel(%arg0: i32, %arg1: memref<512x128xf32, #tpu.memory_space<vmem>>, %arg2: memref<512x128xf32, #tpu.memory_space<vmem>>, %arg3: memref<512x128xf32, #tpu.memory_space<vmem>>, %arg4: memref<3x128xf32, #tpu.memory_space<vmem>>, %arg5: memref<1x1xf32, #tpu.memory_space<smem>>, %arg6: memref<512x1xf32, #tpu.memory_space<vmem>>) attributes {dimension_semantics = [#tpu.dimension_semantics<parallel>], iteration_bounds = array<i64: 2>, scalar_prefetch = 0 : i64, scratch_operands = 0 : i64, tpu.core_type = #tpu.core_type<tc>, window_params = [{transform_indices = @transform_0, window_bounds = array<i64: 512, 128>}, {transform_indices = @transform_1, window_bounds = array<i64: 512, 128>}, {transform_indices = @transform_2, window_bounds = array<i64: 512, 128>}, {pipeline_mode = #tpu.pipeline_mode<synchronous>, transform_indices = @transform_3, window_bounds = array<i64: 3, 128>}, {transform_indices = @transform_4, window_bounds = array<i64: 1, 1>}, {transform_indices = @transform_5, window_bounds = array<i64: 512, 1>}]} {
    %c0 = arith.constant 0 : index
    %c0_0 = arith.constant 0 : index
    %0 = vector.load %arg1[%c0, %c0_0] : memref<512x128xf32, #tpu.memory_space<vmem>>, vector<512x128xf32>
    %c0_1 = arith.constant 0 : index
    %c0_2 = arith.constant 0 : index
    %1 = vector.load %arg2[%c0_1, %c0_2] : memref<512x128xf32, #tpu.memory_space<vmem>>, vector<512x128xf32>
    %c0_3 = arith.constant 0 : index
    %c0_4 = arith.constant 0 : index
    %2 = vector.load %arg3[%c0_3, %c0_4] : memref<512x128xf32, #tpu.memory_space<vmem>>, vector<512x128xf32>
    %c0_5 = arith.constant 0 : index
    %c0_6 = arith.constant 0 : index
    %3 = vector.load %arg4[%c0_5, %c0_6] : memref<3x128xf32, #tpu.memory_space<vmem>>, vector<3x128xf32>
    %4 = vector.extract_strided_slice %3 {offsets = [0, 0], sizes = [1, 128], strides = [1, 1]} : vector<3x128xf32> to vector<1x128xf32>
    %5 = vector.extract_strided_slice %3 {offsets = [1, 0], sizes = [1, 128], strides = [1, 1]} : vector<3x128xf32> to vector<1x128xf32>
    %6 = vector.extract_strided_slice %3 {offsets = [2, 0], sizes = [1, 128], strides = [1, 1]} : vector<3x128xf32> to vector<1x128xf32>
    %7 = vector.broadcast %4 : vector<1x128xf32> to vector<512x128xf32>
    %8 = arith.mulf %0, %7 : vector<512x128xf32>
    %9 = vector.broadcast %5 : vector<1x128xf32> to vector<512x128xf32>
    %10 = arith.mulf %1, %9 : vector<512x128xf32>
    %11 = arith.addf %8, %10 : vector<512x128xf32>
    %12 = vector.broadcast %6 : vector<1x128xf32> to vector<512x128xf32>
    %13 = arith.mulf %2, %12 : vector<512x128xf32>
    %14 = arith.addf %11, %13 : vector<512x128xf32>
    %cst = arith.constant dense<0.000000e+00> : vector<512xf32>
    %15 = vector.multi_reduction <add>, %14, %cst [1] : vector<512x128xf32> to vector<512xf32>
    %16 = vector.shape_cast %15 : vector<512xf32> to vector<512x1xf32>
    %c0_7 = arith.constant 0 : index
    %c0_8 = arith.constant 0 : index
    %17 = memref.load %arg5[%c0_7, %c0_8] : memref<1x1xf32, #tpu.memory_space<smem>>
    %18 = vector.broadcast %17 : f32 to vector<512x1xf32>
    %19 = arith.addf %16, %18 : vector<512x1xf32>
    %20 = arith.negf %19 : vector<512x1xf32>
    %21 = math.exp %20 : vector<512x1xf32>
    %cst_9 = arith.constant 1.000000e+00 : f32
    %22 = vector.broadcast %cst_9 : f32 to vector<512x1xf32>
    %23 = arith.addf %22, %21 : vector<512x1xf32>
    %24 = arith.divf %22, %23 : vector<512x1xf32>
    %c0_10 = arith.constant 0 : index
    %c0_11 = arith.constant 0 : index
    %25 = vector.load %arg6[%c0_10, %c0_11] : memref<512x1xf32, #tpu.memory_space<vmem>>, vector<512x1xf32>
    tpu.vector_store %arg6[%c0_10, %c0_11], %24 {strides = array<i32>} : memref<512x1xf32, #tpu.memory_space<vmem>>, vector<512x1xf32>,
    return
  }
  func.func @transform_0(%arg0: i32) -> (i32, i32) {
    %c0_i32 = arith.constant 0 : i32
    %c0_i32_0 = arith.constant 0 : i32
    return %arg0, %c0_i32 : i32, i32
  }
  func.func @transform_1(%arg0: i32) -> (i32, i32) {
    %c0_i32 = arith.constant 0 : i32
    %c0_i32_0 = arith.constant 0 : i32
    return %arg0, %c0_i32 : i32, i32
  }
  func.func @transform_2(%arg0: i32) -> (i32, i32) {
    %c0_i32 = arith.constant 0 : i32
    %c0_i32_0 = arith.constant 0 : i32
    return %arg0, %c0_i32 : i32, i32
  }
  func.func @transform_3(%arg0: i32) -> (i32, i32) {
    %c0_i32 = arith.constant 0 : i32
    %c0_i32_0 = arith.constant 0 : i32
    %c0_i32_1 = arith.constant 0 : i32
    return %c0_i32, %c0_i32_0 : i32, i32
  }
  func.func @transform_4(%arg0: i32) -> (i32, i32) {
    %c0_i32 = arith.constant 0 : i32
    %c0_i32_0 = arith.constant 0 : i32
    %c0_i32_1 = arith.constant 0 : i32
    return %c0_i32, %c0_i32_0 : i32, i32
  }
  func.func @transform_5(%arg0: i32) -> (i32, i32) {
    %c0_i32 = arith.constant 0 : i32
    %c0_i32_0 = arith.constant 0 : i32
    return %arg0, %c0_i32 : i32, i32
  }
}

</mosaic_0001>

<llo_original>
// kernel: tpu_custom_call.1
$region0: #{tpu_custom_call.1}
  #allocation0 [shape = 'u32[]', space=smem, size = 0x4, offset = 0x4, fixed_abs, tag = 'smem constant byte address 0x4 - core index']
  #allocation1 [shape = 'u32[144,128]{1,0:T(1,128)}', space=vmem, size = 0x12000, scoped, tag = 'internal scratch']
  #allocation2 [shape = 'f32[1,1]{1,0:T(1,128)S(6)}', space=smem, size = 0x200, scoped, tag = 'scoped memory for tpu_custom_call.1']
  %s0 = inlined_call_operand.hbm [shape: f32[1024,128], index: 0, kind: input, shape index: {}]
  %s1 = inlined_call_operand.hbm [shape: f32[1024,128], index: 1, kind: input, shape index: {}]
  %s2 = inlined_call_operand.hbm [shape: f32[1024,128], index: 2, kind: input, shape index: {}]
  %s3 = inlined_call_operand.vmem [shape: f32[3,128], index: 3, kind: input, shape index: {}]
  %s4 = inlined_call_operand.<no memory space> [shape: f32[1,1], index: 4, kind: input, shape index: {}]
  %s5 = inlined_call_operand.vmem [shape: f32[1024,1], index: 5, kind: output, shape index: {}]
  %s6 = sld [smem:[#allocation0]]
  $region65: #{tpu_custom_call.1} parent=0
    _
  %s8 = ssub.s32 1, %s6
  %s9 = scalar_select 0, %s8, %s6
  %10 = sst [smem:[#allocation2]] %s4
  $region1: #{tpu_custom_call.1} parent=0
    #allocation3 [shape = 'u8[524288]{0}', space=vmem, size = 0x80000, scoped, tag = 'input window, operand 0']
    #allocation4 [shape = 's32[2]{0}', space=sflag, size = 0x8, scoped, tag = 'scoped memory for tpu_custom_call.1']
    #allocation5 [shape = 'u8[524288]{0}', space=vmem, size = 0x80000, scoped, tag = 'input window, operand 1']
    #allocation6 [shape = 's32[2]{0}', space=sflag, size = 0x8, scoped, tag = 'scoped memory for tpu_custom_call.1']
    #allocation7 [shape = 'u8[524288]{0}', space=vmem, size = 0x80000, scoped, tag = 'input window, operand 2']
    %11 = vsyncpa [#allocation4], 0
    %s12 = scalar_lea.sflag [#allocation4], 1
    %13 = vsyncpa %s12, 0
    %14 = vsyncpa [#allocation6], 0
    %s15 = scalar_lea.sflag [#allocation6], 1
    %16 = vsyncpa %s15, 0
    loop: start=0, step=1, limit=4
    $region2: #{tpu_custom_call.1} parent=1 // loop_pre_header
      _
    $region3: #{tpu_custom_call.1} parent=1 // loop_header
      %s18 = sphi 0, %s22
      %p19 = scmp.ge.s32.totalorder %s18, 4
      %s28 = sphi 0, %s30
      %s31 = sphi 0, %s28
      %s32 = sphi 0, %s31
      %s48 = sphi 0, %s32
      %s54 = sphi 0, %s56
      %s57 = sphi 0, %s54
      %s58 = sphi 0, %s57
      %s74 = sphi 0, %s58
      %s80 = sphi 0, %s82
      %s83 = sphi 0, %s80
      %s84 = sphi 0, %s83
      %s100 = sphi 0, %s84
      %s104 = sphi 0, %s104
      %s106 = sphi 0, %s104
      %s107 = sphi 0, %s106
      %s121 = sphi 0, %s107
      %s125 = sphi 0, %s125
      %s127 = sphi 0, %s125
      %s128 = sphi 0, %s127
      %s142 = sphi 0, %s128
      %s148 = sphi 0, %s150
      %s151 = sphi 0, %s148
      %s152 = sphi 0, %s151
      %s168 = sphi 0, %s152
    $region4: #{tpu_custom_call.1} parent=1 // loop_header_branch
      %21 = sbr.rel (%p19) target = $region8
    $region5: #{tpu_custom_call.1} parent=1 // loop_body
      %s23 = ssub.s32 %s18, 1
      %s24 = ssub.s32 %s18, 2
      %s25 = sadd.s32 %s18, 1
      %s26 = ssub.s32 %s18, %s25
      %p27 = scmp.eq.s32.totalorder %s26, 0
      %s29 = sadd.s32 %s28, 1
      %s30 = scalar_select %p27, %s28, %s29
      %p33 = pneg %p27
      %p34 = scmp.eq.s32.totalorder %s18, 1
      %p35 = por %p33, %p34
      %p36 = scmp.ne.s32.totalorder %s28, %s31
      %p37 = scmp.eq.s32.totalorder %s18, 0
      %p38 = por %p36, %p37
      %p39 = scmp.ne.s32.totalorder %s28, %s31
      %p40 = scmp.eq.s32.totalorder %s23, 1
      %p41 = por %p39, %p40
      %p42 = scmp.ne.s32.totalorder %s31, %s32
      %p43 = scmp.eq.s32.totalorder %s23, 0
      %p44 = por %p42, %p43
      %p45 = scmp.ne.s32.totalorder %s31, %s32
      %p46 = scmp.eq.s32.totalorder %s24, 1
      %p47 = por %p45, %p46
      %p49 = scmp.ne.s32.totalorder %s32, %s48
      %p50 = scmp.eq.s32.totalorder %s24, 0
      %p51 = por %p49, %p50
      %s52 = ssub.s32 %s18, %s25
      %p53 = scmp.eq.s32.totalorder %s52, 0
      %s55 = sadd.s32 %s54, 1
      %s56 = scalar_select %p53, %s54, %s55
      %p59 = pneg %p53
      %p60 = scmp.eq.s32.totalorder %s18, 1
      %p61 = por %p59, %p60
      %p62 = scmp.ne.s32.totalorder %s54, %s57
      %p63 = scmp.eq.s32.totalorder %s18, 0
      %p64 = por %p62, %p63
      %p65 = scmp.ne.s32.totalorder %s54, %s57
      %p66 = scmp.eq.s32.totalorder %s23, 1
      %p67 = por %p65, %p66
      %p68 = scmp.ne.s32.totalorder %s57, %s58
      %p69 = scmp.eq.s32.totalorder %s23, 0
      %p70 = por %p68, %p69
      %p71 = scmp.ne.s32.totalorder %s57, %s58
      %p72 = scmp.eq.s32.totalorder %s24, 1
      %p73 = por %p71, %p72
      %p75 = scmp.ne.s32.totalorder %s58, %s74
      %p76 = scmp.eq.s32.totalorder %s24, 0
      %p77 = por %p75, %p76
      %s78 = ssub.s32 %s18, %s25
      %p79 = scmp.eq.s32.totalorder %s78, 0
      %s81 = sadd.s32 %s80, 1
      %s82 = scalar_select %p79, %s80, %s81
      %p85 = pneg %p79
      %p86 = scmp.eq.s32.totalorder %s18, 1
      %p87 = por %p85, %p86
      %p88 = scmp.ne.s32.totalorder %s80, %s83
      %p89 = scmp.eq.s32.totalorder %s18, 0
      %p90 = por %p88, %p89
      %p91 = scmp.ne.s32.totalorder %s80, %s83
      %p92 = scmp.eq.s32.totalorder %s23, 1
      %p93 = por %p91, %p92
      %p94 = scmp.ne.s32.totalorder %s83, %s84
      %p95 = scmp.eq.s32.totalorder %s23, 0
      %p96 = por %p94, %p95
      %p97 = scmp.ne.s32.totalorder %s83, %s84
      %p98 = scmp.eq.s32.totalorder %s24, 1
      %p99 = por %p97, %p98
      %p101 = scmp.ne.s32.totalorder %s84, %s100
      %p102 = scmp.eq.s32.totalorder %s24, 0
      %p103 = por %p101, %p102
      %s105 = sadd.s32 %s104, 1
      %p108 = scmp.eq.s32.totalorder %s18, 1
      %p109 = scmp.ne.s32.totalorder %s104, %s106
      %p110 = scmp.eq.s32.totalorder %s18, 0
      %p111 = por %p109, %p110
      %p112 = scmp.ne.s32.totalorder %s104, %s106
      %p113 = scmp.eq.s32.totalorder %s23, 1
      %p114 = por %p112, %p113
      %p115 = scmp.ne.s32.totalorder %s106, %s107
      %p116 = scmp.eq.s32.totalorder %s23, 0
      %p117 = por %p115, %p116
      %p118 = scmp.ne.s32.totalorder %s106, %s107
      %p119 = scmp.eq.s32.totalorder %s24, 1
      %p120 = por %p118, %p119
      %p122 = scmp.ne.s32.totalorder %s107, %s121
      %p123 = scmp.eq.s32.totalorder %s24, 0
      %p124 = por %p122, %p123
      %s126 = sadd.s32 %s125, 1
      %p129 = scmp.eq.s32.totalorder %s18, 1
      %p130 = scmp.ne.s32.totalorder %s125, %s127
      %p131 = scmp.eq.s32.totalorder %s18, 0
      %p132 = por %p130, %p131
      %p133 = scmp.ne.s32.totalorder %s125, %s127
      %p134 = scmp.eq.s32.totalorder %s23, 1
      %p135 = por %p133, %p134
      %p136 = scmp.ne.s32.totalorder %s127, %s128
      %p137 = scmp.eq.s32.totalorder %s23, 0
      %p138 = por %p136, %p137
      %p139 = scmp.ne.s32.totalorder %s127, %s128
      %p140 = scmp.eq.s32.totalorder %s24, 1
      %p141 = por %p139, %p140
      %p143 = scmp.ne.s32.totalorder %s128, %s142
      %p144 = scmp.eq.s32.totalorder %s24, 0
      %p145 = por %p143, %p144
      %s146 = ssub.s32 %s18, %s25
      %p147 = scmp.eq.s32.totalorder %s146, 0
      %s149 = sadd.s32 %s148, 1
      %s150 = scalar_select %p147, %s148, %s149
      %p153 = pneg %p147
      %p154 = scmp.eq.s32.totalorder %s18, 1
      %p155 = por %p153, %p154
      %p156 = scmp.ne.s32.totalorder %s148, %s151
      %p157 = scmp.eq.s32.totalorder %s18, 0
      %p158 = por %p156, %p157
      %p159 = scmp.ne.s32.totalorder %s148, %s151
      %p160 = scmp.eq.s32.totalorder %s23, 1
      %p161 = por %p159, %p160
      %p162 = scmp.ne.s32.totalorder %s151, %s152
      %p163 = scmp.eq.s32.totalorder %s23, 0
      %p164 = por %p162, %p163
      %p165 = scmp.ne.s32.totalorder %s151, %s152
      %p166 = scmp.eq.s32.totalorder %s24, 1
      %p167 = por %p165, %p166
      %p169 = scmp.ne.s32.totalorder %s152, %s168
      %p170 = scmp.eq.s32.totalorder %s24, 0
      %p171 = por %p169, %p170
      %p172 = scmp.le.s32.totalorder 1, %s18
      %p173 = scmp.lt.s32.totalorder %s18, 3
      %p174 = pnand %p172, %p173
      %p175 = pneg %p174
      // Predicated region
      $region9: #{tpu_custom_call.1} parent=5 // pred_check
        _
      $region10: #{tpu_custom_call.1} parent=5 // pred_check_branch
        %177 = sbr.rel (%p174) target = $region12
      $region11: #{tpu_custom_call.1} parent=5 // pred_region
        %s178 = ssub.s32 %s18, 1
        // Predicated region
        $region13: #{tpu_custom_call.1} parent=11 // pred_check
          %p179 = pneg %p117
        $region14: #{tpu_custom_call.1} parent=11 // pred_check_branch
          %181 = sbr.rel (%p179) target = $region16
        $region15: #{tpu_custom_call.1} parent=11 // pred_region
          _
        $region16: #{tpu_custom_call.1} parent=11 // pred_fallthru
          _
        // Predicated region
        $region17: #{tpu_custom_call.1} parent=11 // pred_check
          %p182 = pneg %p138
        $region18: #{tpu_custom_call.1} parent=11 // pred_check_branch
          %184 = sbr.rel (%p182) target = $region20
        $region19: #{tpu_custom_call.1} parent=11 // pred_region
          _
        $region20: #{tpu_custom_call.1} parent=11 // pred_fallthru
          _
      $region12: #{tpu_custom_call.1} parent=5 // pred_fallthru
        _
      %p185 = scmp.lt.s32.totalorder %s18, 2
      // Predicated region
      $region21: #{tpu_custom_call.1} parent=5 // pred_check
        %p186 = pneg %p185
      $region22: #{tpu_custom_call.1} parent=5 // pred_check_branch
        %188 = sbr.rel (%p186) target = $region24
      $region23: #{tpu_custom_call.1} parent=5 // pred_region
        // Predicated region
        $region25: #{tpu_custom_call.1} parent=23 // pred_check
          %p189 = pneg %p38
        $region26: #{tpu_custom_call.1} parent=23 // pred_check_branch
          %191 = sbr.rel (%p189) target = $region28
        $region27: #{tpu_custom_call.1} parent=23 // pred_region
          %s192 = sand.u32 %s28, 1
          %s193 = scalar_lea.sflag [#allocation4], %s192
          %s194 = sand.u32 %s28, 1
          %s195 = smul.addr %s194, 512
          %s196 = scalar_lea.vmem [#allocation3], %s195
          %s197 = smul.u32 64, %s18
          %s199 = ssub.s32 8192, 8192
          %200 = vsyncadd %s193, %s199
          %s201 = smul.addr %s197, 128
          %s202 = scalar_lea.hbm %s0, %s201
          %s203 = sshll.u32 %s196, 4
          %s204 = int_to_ptr.vmem [resolvable:$true] %s203
          %209 = dma.hbm_to_vmem [thread:$0]  %s202, 8192, %s204, %s193, 128, 128, 8
        $region28: #{tpu_custom_call.1} parent=23 // pred_fallthru
          _
        // Predicated region
        $region29: #{tpu_custom_call.1} parent=23 // pred_check
          %p210 = pneg %p64
        $region30: #{tpu_custom_call.1} parent=23 // pred_check_branch
          %212 = sbr.rel (%p210) target = $region32
        $region31: #{tpu_custom_call.1} parent=23 // pred_region
          %s213 = sand.u32 %s18, 1
          %s214 = scalar_lea.sflag [#allocation6], %s213
          %s215 = sand.u32 %s54, 1
          %s216 = smul.addr %s215, 512
          %s217 = scalar_lea.vmem [#allocation5], %s216
          %s218 = smul.u32 64, %s18
          %s220 = ssub.s32 8192, 8192
          %221 = vsyncadd %s214, %s220
          %s222 = smul.addr %s218, 128
          %s223 = scalar_lea.hbm %s1, %s222
          %s224 = sshll.u32 %s217, 4
          %s225 = int_to_ptr.vmem [resolvable:$true] %s224
          %230 = dma.hbm_to_vmem [thread:$0]  %s223, 8192, %s225, %s214, 128, 128, 8
        $region32: #{tpu_custom_call.1} parent=23 // pred_fallthru
          _
        // Predicated region
        $region33: #{tpu_custom_call.1} parent=23 // pred_check
          %p231 = pneg %p90
        $region34: #{tpu_custom_call.1} parent=23 // pred_check_branch
          %233 = sbr.rel (%p231) target = $region36
        $region35: #{tpu_custom_call.1} parent=23 // pred_region
          %s234 = sand.u32 %s18, 1
          %s235 = scalar_lea.sflag [#allocation6], %s234
          %s236 = sand.u32 %s80, 1
          %s237 = smul.addr %s236, 512
          %s238 = scalar_lea.vmem [#allocation7], %s237
          %s239 = smul.u32 64, %s18
          %s241 = ssub.s32 8192, 8192
          %242 = vsyncadd %s235, %s241
          %s243 = smul.addr %s239, 128
          %s244 = scalar_lea.hbm %s2, %s243
          %s245 = sshll.u32 %s238, 4
          %s246 = int_to_ptr.vmem [resolvable:$true] %s245
          %251 = dma.hbm_to_vmem [thread:$0]  %s244, 8192, %s246, %s235, 128, 128, 8
        $region36: #{tpu_custom_call.1} parent=23 // pred_fallthru
          _
      $region24: #{tpu_custom_call.1} parent=5 // pred_fallthru
        _
      %p252 = scmp.le.s32.totalorder 1, %s18
      %p253 = scmp.lt.s32.totalorder %s18, 3
      %p254 = pnand %p252, %p253
      %p255 = pneg %p254
      // Predicated region
      $region37: #{tpu_custom_call.1} parent=5 // pred_check
        _
      $region38: #{tpu_custom_call.1} parent=5 // pred_check_branch
        %257 = sbr.rel (%p254) target = $region40
      $region39: #{tpu_custom_call.1} parent=5 // pred_region
        %s258 = ssub.s32 %s18, 1
        %s259 = sand.u32 %s31, 1
        %s260 = scalar_lea.sflag [#allocation4], %s259
        %s261 = sand.u32 %s31, 1
        %s262 = smul.addr %s261, 512
        %s263 = scalar_lea.vmem [#allocation3], %s262
        // Predicated region
        $region41: #{tpu_custom_call.1} parent=39 // pred_check
          %p264 = pneg %p44
        $region42: #{tpu_custom_call.1} parent=39 // pred_check_branch
          %266 = sbr.rel (%p264) target = $region44
        $region43: #{tpu_custom_call.1} parent=39 // pred_region
          %267 = dma.done %s260, 8192
        $region44: #{tpu_custom_call.1} parent=39 // pred_fallthru
          _
        %s268 = sand.u32 %s23, 1
        %s269 = scalar_lea.sflag [#allocation6], %s268
        %s270 = sand.u32 %s57, 1
        %s271 = smul.addr %s270, 512
        %s272 = scalar_lea.vmem [#allocation5], %s271
        // Predicated region
        $region45: #{tpu_custom_call.1} parent=39 // pred_check
          %p273 = pneg %p70
        $region46: #{tpu_custom_call.1} parent=39 // pred_check_branch
          %275 = sbr.rel (%p273) target = $region48
        $region47: #{tpu_custom_call.1} parent=39 // pred_region
          %276 = dma.done %s269, 8192
        $region48: #{tpu_custom_call.1} parent=39 // pred_fallthru
          _
        %s277 = sand.u32 %s23, 1
        %s278 = scalar_lea.sflag [#allocation6], %s277
        %s279 = sand.u32 %s83, 1
        %s280 = smul.addr %s279, 512
        %s281 = scalar_lea.vmem [#allocation7], %s280
        // Predicated region
        $region49: #{tpu_custom_call.1} parent=39 // pred_check
          %p282 = pneg %p96
        $region50: #{tpu_custom_call.1} parent=39 // pred_check_branch
          %284 = sbr.rel (%p282) target = $region52
        $region51: #{tpu_custom_call.1} parent=39 // pred_region
          %285 = dma.done %s278, 8192
        $region52: #{tpu_custom_call.1} parent=39 // pred_fallthru
          _
        %s286 = sand.u32 %s31, 1
        %s287 = scalar_lea.sflag [#allocation4], %s286
        %s288 = sand.u32 %s31, 1
        %s289 = smul.addr %s288, 512
        %s290 = scalar_lea.vmem [#allocation3], %s289
        %p291 = pneg %p44
        %p292 = pneg %p41
        %s293 = sand.u32 %s23, 1
        %s294 = scalar_lea.sflag [#allocation6], %s293
        %s295 = sand.u32 %s57, 1
        %s296 = smul.addr %s295, 512
        %s297 = scalar_lea.vmem [#allocation5], %s296
        %p298 = pneg %p70
        %p299 = pneg %p67
        %s300 = sand.u32 %s23, 1
        %s301 = scalar_lea.sflag [#allocation6], %s300
        %s302 = sand.u32 %s83, 1
        %s303 = smul.addr %s302, 512
        %s304 = scalar_lea.vmem [#allocation7], %s303
        %p305 = pneg %p96
        %p306 = pneg %p93
        %p307 = pneg %p117
        %p308 = pneg %p114
        %p309 = pneg %p138
        %p310 = pneg %p135
        %p311 = pneg %p164
        %p312 = pneg %p161
        %s313 = smul.u32 64, %s23
        %p314 = scmp.lt.s32.totalorder %s313, 127
        %s315 = scalar_select %p314, %s313, 127
        %s316 = smul.addr %s315, 8
        %s317 = scalar_lea.vmem %s5, %s316
        %s318 = smul.u32 64, %s23
        %s319 = smul.u32 64, %s23
        %s320 = smul.u32 64, %s23
        %s321 = smul.u32 64, %s23
        %p322 = scmp.lt.s32.totalorder %s321, 127
        %s323 = scalar_select %p322, %s321, 127
        %s324 = smul.addr %s323, 8
        %s325 = scalar_lea.vmem %s5, %s324
        %s326 = smul.u32 64, %s23
        %v327 = vld [vmem:[%s263] sm:$0xff]
        %v328 = vld [vmem:[%s263 + $0x8] sm:$0xff]
        %v329 = vld [vmem:[%s263 + $0x10] sm:$0xff]
        %v330 = vld [vmem:[%s263 + $0x18] sm:$0xff]
        %v331 = vld [vmem:[%s263 + $0x20] sm:$0xff]
        %v332 = vld [vmem:[%s263 + $0x28] sm:$0xff]
        %v333 = vld [vmem:[%s263 + $0x30] sm:$0xff]
        %v334 = vld [vmem:[%s263 + $0x38] sm:$0xff]
        %v335 = vld [vmem:[%s263 + $0x40] sm:$0xff]
        %v336 = vld [vmem:[%s263 + $0x48] sm:$0xff]
        %v337 = vld [vmem:[%s263 + $0x50] sm:$0xff]
        %v338 = vld [vmem:[%s263 + $0x58] sm:$0xff]
        %v339 = vld [vmem:[%s263 + $0x60] sm:$0xff]
        %v340 = vld [vmem:[%s263 + $0x68] sm:$0xff]
        %v341 = vld [vmem:[%s263 + $0x70] sm:$0xff]
        %v342 = vld [vmem:[%s263 + $0x78] sm:$0xff]
        %v343 = vld [vmem:[%s263 + $0x80] sm:$0xff]
        %v344 = vld [vmem:[%s263 + $0x88] sm:$0xff]
        %v345 = vld [vmem:[%s263 + $0x90] sm:$0xff]
        %v346 = vld [vmem:[%s263 + $0x98] sm:$0xff]
        %v347 = vld [vmem:[%s263 + $0xa0] sm:$0xff]
        %v348 = vld [vmem:[%s263 + $0xa8] sm:$0xff]
        %v349 = vld [vmem:[%s263 + $0xb0] sm:$0xff]
        %v350 = vld [vmem:[%s263 + $0xb8] sm:$0xff]
        %v351 = vld [vmem:[%s263 + $0xc0] sm:$0xff]
        %v352 = vld [vmem:[%s263 + $0xc8] sm:$0xff]
        %v353 = vld [vmem:[%s263 + $0xd0] sm:$0xff]
        %v354 = vld [vmem:[%s263 + $0xd8] sm:$0xff]
        %v355 = vld [vmem:[%s263 + $0xe0] sm:$0xff]
        %v356 = vld [vmem:[%s263 + $0xe8] sm:$0xff]
        %v357 = vld [vmem:[%s263 + $0xf0] sm:$0xff]
        %v358 = vld [vmem:[%s263 + $0xf8] sm:$0xff]
        %v359 = vld [vmem:[%s263 + $0x100] sm:$0xff]
        %v360 = vld [vmem:[%s263 + $0x108] sm:$0xff]
        %v361 = vld [vmem:[%s263 + $0x110] sm:$0xff]
        %v362 = vld [vmem:[%s263 + $0x118] sm:$0xff]
        %v363 = vld [vmem:[%s263 + $0x120] sm:$0xff]
        %v364 = vld [vmem:[%s263 + $0x128] sm:$0xff]
        %v365 = vld [vmem:[%s263 + $0x130] sm:$0xff]
        %v366 = vld [vmem:[%s263 + $0x138] sm:$0xff]
        %v367 = vld [vmem:[%s263 + $0x140] sm:$0xff]
        %v368 = vld [vmem:[%s263 + $0x148] sm:$0xff]
        %v369 = vld [vmem:[%s263 + $0x150] sm:$0xff]
        %v370 = vld [vmem:[%s263 + $0x158] sm:$0xff]
        %v371 = vld [vmem:[%s263 + $0x160] sm:$0xff]
        %v372 = vld [vmem:[%s263 + $0x168] sm:$0xff]
        %v373 = vld [vmem:[%s263 + $0x170] sm:$0xff]
        %v374 = vld [vmem:[%s263 + $0x178] sm:$0xff]
        %v375 = vld [vmem:[%s263 + $0x180] sm:$0xff]
        %v376 = vld [vmem:[%s263 + $0x188] sm:$0xff]
        %v377 = vld [vmem:[%s263 + $0x190] sm:$0xff]
        %v378 = vld [vmem:[%s263 + $0x198] sm:$0xff]
        %v379 = vld [vmem:[%s263 + $0x1a0] sm:$0xff]
        %v380 = vld [vmem:[%s263 + $0x1a8] sm:$0xff]
        %v381 = vld [vmem:[%s263 + $0x1b0] sm:$0xff]
        %v382 = vld [vmem:[%s263 + $0x1b8] sm:$0xff]
        %v383 = vld [vmem:[%s263 + $0x1c0] sm:$0xff]
        %v384 = vld [vmem:[%s263 + $0x1c8] sm:$0xff]
        %v385 = vld [vmem:[%s263 + $0x1d0] sm:$0xff]
        %v386 = vld [vmem:[%s263 + $0x1d8] sm:$0xff]
        %v387 = vld [vmem:[%s263 + $0x1e0] sm:$0xff]
        %v388 = vld [vmem:[%s263 + $0x1e8] sm:$0xff]
        %v389 = vld [vmem:[%s263 + $0x1f0] sm:$0xff]
        %v390 = vld [vmem:[%s263 + $0x1f8] sm:$0xff]
        %v391 = vld [vmem:[%s272] sm:$0xff]
        %v392 = vld [vmem:[%s272 + $0x8] sm:$0xff]
        %v393 = vld [vmem:[%s272 + $0x10] sm:$0xff]
        %v394 = vld [vmem:[%s272 + $0x18] sm:$0xff]
        %v395 = vld [vmem:[%s272 + $0x20] sm:$0xff]
        %v396 = vld [vmem:[%s272 + $0x28] sm:$0xff]
        %v397 = vld [vmem:[%s272 + $0x30] sm:$0xff]
        %v398 = vld [vmem:[%s272 + $0x38] sm:$0xff]
        %v399 = vld [vmem:[%s272 + $0x40] sm:$0xff]
        %v400 = vld [vmem:[%s272 + $0x48] sm:$0xff]
        %v401 = vld [vmem:[%s272 + $0x50] sm:$0xff]
        %v402 = vld [vmem:[%s272 + $0x58] sm:$0xff]
        %v403 = vld [vmem:[%s272 + $0x60] sm:$0xff]
        %v404 = vld [vmem:[%s272 + $0x68] sm:$0xff]
        %v405 = vld [vmem:[%s272 + $0x70] sm:$0xff]
        %v406 = vld [vmem:[%s272 + $0x78] sm:$0xff]
        %v407 = vld [vmem:[%s272 + $0x80] sm:$0xff]
        %v408 = vld [vmem:[%s272 + $0x88] sm:$0xff]
        %v409 = vld [vmem:[%s272 + $0x90] sm:$0xff]
        %v410 = vld [vmem:[%s272 + $0x98] sm:$0xff]
        %v411 = vld [vmem:[%s272 + $0xa0] sm:$0xff]
        %v412 = vld [vmem:[%s272 + $0xa8] sm:$0xff]
        %v413 = vld [vmem:[%s272 + $0xb0] sm:$0xff]
        %v414 = vld [vmem:[%s272 + $0xb8] sm:$0xff]
        %v415 = vld [vmem:[%s272 + $0xc0] sm:$0xff]
        %v416 = vld [vmem:[%s272 + $0xc8] sm:$0xff]
        %v417 = vld [vmem:[%s272 + $0xd0] sm:$0xff]
        %v418 = vld [vmem:[%s272 + $0xd8] sm:$0xff]
        %v419 = vld [vmem:[%s272 + $0xe0] sm:$0xff]
        %v420 = vld [vmem:[%s272 + $0xe8] sm:$0xff]
        %v421 = vld [vmem:[%s272 + $0xf0] sm:$0xff]
        %v422 = vld [vmem:[%s272 + $0xf8] sm:$0xff]
        %v423 = vld [vmem:[%s272 + $0x100] sm:$0xff]
        %v424 = vld [vmem:[%s272 + $0x108] sm:$0xff]
        %v425 = vld [vmem:[%s272 + $0x110] sm:$0xff]
        %v426 = vld [vmem:[%s272 + $0x118] sm:$0xff]
        %v427 = vld [vmem:[%s272 + $0x120] sm:$0xff]
        %v428 = vld [vmem:[%s272 + $0x128] sm:$0xff]
        %v429 = vld [vmem:[%s272 + $0x130] sm:$0xff]
        %v430 = vld [vmem:[%s272 + $0x138] sm:$0xff]
        %v431 = vld [vmem:[%s272 + $0x140] sm:$0xff]
        %v432 = vld [vmem:[%s272 + $0x148] sm:$0xff]
        %v433 = vld [vmem:[%s272 + $0x150] sm:$0xff]
        %v434 = vld [vmem:[%s272 + $0x158] sm:$0xff]
        %v435 = vld [vmem:[%s272 + $0x160] sm:$0xff]
        %v436 = vld [vmem:[%s272 + $0x168] sm:$0xff]
        %v437 = vld [vmem:[%s272 + $0x170] sm:$0xff]
        %v438 = vld [vmem:[%s272 + $0x178] sm:$0xff]
        %v439 = vld [vmem:[%s272 + $0x180] sm:$0xff]
        %v440 = vld [vmem:[%s272 + $0x188] sm:$0xff]
        %v441 = vld [vmem:[%s272 + $0x190] sm:$0xff]
        %v442 = vld [vmem:[%s272 + $0x198] sm:$0xff]
        %v443 = vld [vmem:[%s272 + $0x1a0] sm:$0xff]
        %v444 = vld [vmem:[%s272 + $0x1a8] sm:$0xff]
        %v445 = vld [vmem:[%s272 + $0x1b0] sm:$0xff]
        %v446 = vld [vmem:[%s272 + $0x1b8] sm:$0xff]
        %v447 = vld [vmem:[%s272 + $0x1c0] sm:$0xff]
        %v448 = vld [vmem:[%s272 + $0x1c8] sm:$0xff]
        %v449 = vld [vmem:[%s272 + $0x1d0] sm:$0xff]
        %v450 = vld [vmem:[%s272 + $0x1d8] sm:$0xff]
        %v451 = vld [vmem:[%s272 + $0x1e0] sm:$0xff]
        %v452 = vld [vmem:[%s272 + $0x1e8] sm:$0xff]
        %v453 = vld [vmem:[%s272 + $0x1f0] sm:$0xff]
        %v454 = vld [vmem:[%s272 + $0x1f8] sm:$0xff]
        %v455 = vld [vmem:[%s281] sm:$0xff]
        %v456 = vld [vmem:[%s281 + $0x8] sm:$0xff]
        %v457 = vld [vmem:[%s281 + $0x10] sm:$0xff]
        %v458 = vld [vmem:[%s281 + $0x18] sm:$0xff]
        %v459 = vld [vmem:[%s281 + $0x20] sm:$0xff]
        %v460 = vld [vmem:[%s281 + $0x28] sm:$0xff]
        %v461 = vld [vmem:[%s281 + $0x30] sm:$0xff]
        %v462 = vld [vmem:[%s281 + $0x38] sm:$0xff]
        %v463 = vld [vmem:[%s281 + $0x40] sm:$0xff]
        %v464 = vld [vmem:[%s281 + $0x48] sm:$0xff]
        %v465 = vld [vmem:[%s281 + $0x50] sm:$0xff]
        %v466 = vld [vmem:[%s281 + $0x58] sm:$0xff]
        %v467 = vld [vmem:[%s281 + $0x60] sm:$0xff]
        %v468 = vld [vmem:[%s281 + $0x68] sm:$0xff]
        %v469 = vld [vmem:[%s281 + $0x70] sm:$0xff]
        %v470 = vld [vmem:[%s281 + $0x78] sm:$0xff]
        %v471 = vld [vmem:[%s281 + $0x80] sm:$0xff]
        %v472 = vld [vmem:[%s281 + $0x88] sm:$0xff]
        %v473 = vld [vmem:[%s281 + $0x90] sm:$0xff]
        %v474 = vld [vmem:[%s281 + $0x98] sm:$0xff]
        %v475 = vld [vmem:[%s281 + $0xa0] sm:$0xff]
        %v476 = vld [vmem:[%s281 + $0xa8] sm:$0xff]
        %v477 = vld [vmem:[%s281 + $0xb0] sm:$0xff]
        %v478 = vld [vmem:[%s281 + $0xb8] sm:$0xff]
        %v479 = vld [vmem:[%s281 + $0xc0] sm:$0xff]
        %v480 = vld [vmem:[%s281 + $0xc8] sm:$0xff]
        %v481 = vld [vmem:[%s281 + $0xd0] sm:$0xff]
        %v482 = vld [vmem:[%s281 + $0xd8] sm:$0xff]
        %v483 = vld [vmem:[%s281 + $0xe0] sm:$0xff]
        %v484 = vld [vmem:[%s281 + $0xe8] sm:$0xff]
        %v485 = vld [vmem:[%s281 + $0xf0] sm:$0xff]
        %v486 = vld [vmem:[%s281 + $0xf8] sm:$0xff]
        %v487 = vld [vmem:[%s281 + $0x100] sm:$0xff]
        %v488 = vld [vmem:[%s281 + $0x108] sm:$0xff]
        %v489 = vld [vmem:[%s281 + $0x110] sm:$0xff]
        %v490 = vld [vmem:[%s281 + $0x118] sm:$0xff]
        %v491 = vld [vmem:[%s281 + $0x120] sm:$0xff]
        %v492 = vld [vmem:[%s281 + $0x128] sm:$0xff]
        %v493 = vld [vmem:[%s281 + $0x130] sm:$0xff]
        %v494 = vld [vmem:[%s281 + $0x138] sm:$0xff]
        %v495 = vld [vmem:[%s281 + $0x140] sm:$0xff]
        %v496 = vld [vmem:[%s281 + $0x148] sm:$0xff]
        %v497 = vld [vmem:[%s281 + $0x150] sm:$0xff]
        %v498 = vld [vmem:[%s281 + $0x158] sm:$0xff]
        %v499 = vld [vmem:[%s281 + $0x160] sm:$0xff]
        %v500 = vld [vmem:[%s281 + $0x168] sm:$0xff]
        %v501 = vld [vmem:[%s281 + $0x170] sm:$0xff]
        %v502 = vld [vmem:[%s281 + $0x178] sm:$0xff]
        %v503 = vld [vmem:[%s281 + $0x180] sm:$0xff]
        %v504 = vld [vmem:[%s281 + $0x188] sm:$0xff]
        %v505 = vld [vmem:[%s281 + $0x190] sm:$0xff]
        %v506 = vld [vmem:[%s281 + $0x198] sm:$0xff]
        %v507 = vld [vmem:[%s281 + $0x1a0] sm:$0xff]
        %v508 = vld [vmem:[%s281 + $0x1a8] sm:$0xff]
        %v509 = vld [vmem:[%s281 + $0x1b0] sm:$0xff]
        %v510 = vld [vmem:[%s281 + $0x1b8] sm:$0xff]
        %v511 = vld [vmem:[%s281 + $0x1c0] sm:$0xff]
        %v512 = vld [vmem:[%s281 + $0x1c8] sm:$0xff]
        %v513 = vld [vmem:[%s281 + $0x1d0] sm:$0xff]
        %v514 = vld [vmem:[%s281 + $0x1d8] sm:$0xff]
        %v515 = vld [vmem:[%s281 + $0x1e0] sm:$0xff]
        %v516 = vld [vmem:[%s281 + $0x1e8] sm:$0xff]
        %v517 = vld [vmem:[%s281 + $0x1f0] sm:$0xff]
        %v518 = vld [vmem:[%s281 + $0x1f8] sm:$0xff]
        %v519 = vld [vmem:[%s3] sm:$0x7]
        %v520 = vlaneseq
        %v521 = vshrl.u32 %v520, 7
        %v522 = vsub.s32 0, %v521
        %v523 = vrot.slane %v519, %v522
        %v524 = vmul.f32 %v327, %v523
        %v525 = vmul.f32 %v328, %v523
        %v526 = vmul.f32 %v329, %v523
        %v527 = vmul.f32 %v330, %v523
        %v528 = vmul.f32 %v331, %v523
        %v529 = vmul.f32 %v332, %v523
        %v530 = vmul.f32 %v333, %v523
        %v531 = vmul.f32 %v334, %v523
        %v532 = vmul.f32 %v335, %v523
        %v533 = vmul.f32 %v336, %v523
        %v534 = vmul.f32 %v337, %v523
        %v535 = vmul.f32 %v338, %v523
        %v536 = vmul.f32 %v339, %v523
        %v537 = vmul.f32 %v340, %v523
        %v538 = vmul.f32 %v341, %v523
        %v539 = vmul.f32 %v342, %v523
        %v540 = vmul.f32 %v343, %v523
        %v541 = vmul.f32 %v344, %v523
        %v542 = vmul.f32 %v345, %v523
        %v543 = vmul.f32 %v346, %v523
        %v544 = vmul.f32 %v347, %v523
        %v545 = vmul.f32 %v348, %v523
        %v546 = vmul.f32 %v349, %v523
        %v547 = vmul.f32 %v350, %v523
        %v548 = vmul.f32 %v351, %v523
        %v549 = vmul.f32 %v352, %v523
        %v550 = vmul.f32 %v353, %v523
        %v551 = vmul.f32 %v354, %v523
        %v552 = vmul.f32 %v355, %v523
        %v553 = vmul.f32 %v356, %v523
        %v554 = vmul.f32 %v357, %v523
        %v555 = vmul.f32 %v358, %v523
        %v556 = vmul.f32 %v359, %v523
        %v557 = vmul.f32 %v360, %v523
        %v558 = vmul.f32 %v361, %v523
        %v559 = vmul.f32 %v362, %v523
        %v560 = vmul.f32 %v363, %v523
        %v561 = vmul.f32 %v364, %v523
        %v562 = vmul.f32 %v365, %v523
        %v563 = vmul.f32 %v366, %v523
        %v564 = vmul.f32 %v367, %v523
        %v565 = vmul.f32 %v368, %v523
        %v566 = vmul.f32 %v369, %v523
        %v567 = vmul.f32 %v370, %v523
        %v568 = vmul.f32 %v371, %v523
        %v569 = vmul.f32 %v372, %v523
        %v570 = vmul.f32 %v373, %v523
        %v571 = vmul.f32 %v374, %v523
        %v572 = vmul.f32 %v375, %v523
        %v573 = vmul.f32 %v376, %v523
        %v574 = vmul.f32 %v377, %v523
        %v575 = vmul.f32 %v378, %v523
        %v576 = vmul.f32 %v379, %v523
        %v577 = vmul.f32 %v380, %v523
        %v578 = vmul.f32 %v381, %v523
        %v579 = vmul.f32 %v382, %v523
        %v580 = vmul.f32 %v383, %v523
        %v581 = vmul.f32 %v384, %v523
        %v582 = vmul.f32 %v385, %v523
        %v583 = vmul.f32 %v386, %v523
        %v584 = vmul.f32 %v387, %v523
        %v585 = vmul.f32 %v388, %v523
        %v586 = vmul.f32 %v389, %v523
        %v587 = vmul.f32 %v390, %v523
        %v588 = vlaneseq
        %v589 = vshrl.u32 %v588, 7
        %v590 = vsub.s32 1, %v589
        %v591 = vrot.slane %v519, %v590
        %v592 = vmul.f32 %v391, %v591
        %v593 = vmul.f32 %v392, %v591
        %v594 = vmul.f32 %v393, %v591
        %v595 = vmul.f32 %v394, %v591
        %v596 = vmul.f32 %v395, %v591
        %v597 = vmul.f32 %v396, %v591
        %v598 = vmul.f32 %v397, %v591
        %v599 = vmul.f32 %v398, %v591
        %v600 = vmul.f32 %v399, %v591
        %v601 = vmul.f32 %v400, %v591
        %v602 = vmul.f32 %v401, %v591
        %v603 = vmul.f32 %v402, %v591
        %v604 = vmul.f32 %v403, %v591
        %v605 = vmul.f32 %v404, %v591
        %v606 = vmul.f32 %v405, %v591
        %v607 = vmul.f32 %v406, %v591
        %v608 = vmul.f32 %v407, %v591
        %v609 = vmul.f32 %v408, %v591
        %v610 = vmul.f32 %v409, %v591
        %v611 = vmul.f32 %v410, %v591
        %v612 = vmul.f32 %v411, %v591
        %v613 = vmul.f32 %v412, %v591
        %v614 = vmul.f32 %v413, %v591
        %v615 = vmul.f32 %v414, %v591
        %v616 = vmul.f32 %v415, %v591
        %v617 = vmul.f32 %v416, %v591
        %v618 = vmul.f32 %v417, %v591
        %v619 = vmul.f32 %v418, %v591
        %v620 = vmul.f32 %v419, %v591
        %v621 = vmul.f32 %v420, %v591
        %v622 = vmul.f32 %v421, %v591
        %v623 = vmul.f32 %v422, %v591
        %v624 = vmul.f32 %v423, %v591
        %v625 = vmul.f32 %v424, %v591
        %v626 = vmul.f32 %v425, %v591
        %v627 = vmul.f32 %v426, %v591
        %v628 = vmul.f32 %v427, %v591
        %v629 = vmul.f32 %v428, %v591
        %v630 = vmul.f32 %v429, %v591
        %v631 = vmul.f32 %v430, %v591
        %v632 = vmul.f32 %v431, %v591
        %v633 = vmul.f32 %v432, %v591
        %v634 = vmul.f32 %v433, %v591
        %v635 = vmul.f32 %v434, %v591
        %v636 = vmul.f32 %v435, %v591
        %v637 = vmul.f32 %v436, %v591
        %v638 = vmul.f32 %v437, %v591
        %v639 = vmul.f32 %v438, %v591
        %v640 = vmul.f32 %v439, %v591
        %v641 = vmul.f32 %v440, %v591
        %v642 = vmul.f32 %v441, %v591
        %v643 = vmul.f32 %v442, %v591
        %v644 = vmul.f32 %v443, %v591
        %v645 = vmul.f32 %v444, %v591
        %v646 = vmul.f32 %v445, %v591
        %v647 = vmul.f32 %v446, %v591
        %v648 = vmul.f32 %v447, %v591
        %v649 = vmul.f32 %v448, %v591
        %v650 = vmul.f32 %v449, %v591
        %v651 = vmul.f32 %v450, %v591
        %v652 = vmul.f32 %v451, %v591
        %v653 = vmul.f32 %v452, %v591
        %v654 = vmul.f32 %v453, %v591
        %v655 = vmul.f32 %v454, %v591
        %v656 = vadd.f32 %v524, %v592
        %v657 = vadd.f32 %v525, %v593
        %v658 = vadd.f32 %v526, %v594
        %v659 = vadd.f32 %v527, %v595
        %v660 = vadd.f32 %v528, %v596
        %v661 = vadd.f32 %v529, %v597
        %v662 = vadd.f32 %v530, %v598
        %v663 = vadd.f32 %v531, %v599
        %v664 = vadd.f32 %v532, %v600
        %v665 = vadd.f32 %v533, %v601
        %v666 = vadd.f32 %v534, %v602
        %v667 = vadd.f32 %v535, %v603
        %v668 = vadd.f32 %v536, %v604
        %v669 = vadd.f32 %v537, %v605
        %v670 = vadd.f32 %v538, %v606
        %v671 = vadd.f32 %v539, %v607
        %v672 = vadd.f32 %v540, %v608
        %v673 = vadd.f32 %v541, %v609
        %v674 = vadd.f32 %v542, %v610
        %v675 = vadd.f32 %v543, %v611
        %v676 = vadd.f32 %v544, %v612
        %v677 = vadd.f32 %v545, %v613
        %v678 = vadd.f32 %v546, %v614
        %v679 = vadd.f32 %v547, %v615
        %v680 = vadd.f32 %v548, %v616
        %v681 = vadd.f32 %v549, %v617
        %v682 = vadd.f32 %v550, %v618
        %v683 = vadd.f32 %v551, %v619
        %v684 = vadd.f32 %v552, %v620
        %v685 = vadd.f32 %v553, %v621
        %v686 = vadd.f32 %v554, %v622
        %v687 = vadd.f32 %v555, %v623
        %v688 = vadd.f32 %v556, %v624
        %v689 = vadd.f32 %v557, %v625
        %v690 = vadd.f32 %v558, %v626
        %v691 = vadd.f32 %v559, %v627
        %v692 = vadd.f32 %v560, %v628
        %v693 = vadd.f32 %v561, %v629
        %v694 = vadd.f32 %v562, %v630
        %v695 = vadd.f32 %v563, %v631
        %v696 = vadd.f32 %v564, %v632
        %v697 = vadd.f32 %v565, %v633
        %v698 = vadd.f32 %v566, %v634
        %v699 = vadd.f32 %v567, %v635
        %v700 = vadd.f32 %v568, %v636
        %v701 = vadd.f32 %v569, %v637
        %v702 = vadd.f32 %v570, %v638
        %v703 = vadd.f32 %v571, %v639
        %v704 = vadd.f32 %v572, %v640
        %v705 = vadd.f32 %v573, %v641
        %v706 = vadd.f32 %v574, %v642
        %v707 = vadd.f32 %v575, %v643
        %v708 = vadd.f32 %v576, %v644
        %v709 = vadd.f32 %v577, %v645
        %v710 = vadd.f32 %v578, %v646
        %v711 = vadd.f32 %v579, %v647
        %v712 = vadd.f32 %v580, %v648
        %v713 = vadd.f32 %v581, %v649
        %v714 = vadd.f32 %v582, %v650
        %v715 = vadd.f32 %v583, %v651
        %v716 = vadd.f32 %v584, %v652
        %v717 = vadd.f32 %v585, %v653
        %v718 = vadd.f32 %v586, %v654
        %v719 = vadd.f32 %v587, %v655
        %v720 = vlaneseq
        %v721 = vshrl.u32 %v720, 7
        %v722 = vsub.s32 2, %v721
        %v723 = vrot.slane %v519, %v722
        %v724 = vmul.f32 %v455, %v723
        %v725 = vmul.f32 %v456, %v723
        %v726 = vmul.f32 %v457, %v723
        %v727 = vmul.f32 %v458, %v723
        %v728 = vmul.f32 %v459, %v723
        %v729 = vmul.f32 %v460, %v723
        %v730 = vmul.f32 %v461, %v723
        %v731 = vmul.f32 %v462, %v723
        %v732 = vmul.f32 %v463, %v723
        %v733 = vmul.f32 %v464, %v723
        %v734 = vmul.f32 %v465, %v723
        %v735 = vmul.f32 %v466, %v723
        %v736 = vmul.f32 %v467, %v723
        %v737 = vmul.f32 %v468, %v723
        %v738 = vmul.f32 %v469, %v723
        %v739 = vmul.f32 %v470, %v723
        %v740 = vmul.f32 %v471, %v723
        %v741 = vmul.f32 %v472, %v723
        %v742 = vmul.f32 %v473, %v723
        %v743 = vmul.f32 %v474, %v723
        %v744 = vmul.f32 %v475, %v723
        %v745 = vmul.f32 %v476, %v723
        %v746 = vmul.f32 %v477, %v723
        %v747 = vmul.f32 %v478, %v723
        %v748 = vmul.f32 %v479, %v723
        %v749 = vmul.f32 %v480, %v723
        %v750 = vmul.f32 %v481, %v723
        %v751 = vmul.f32 %v482, %v723
        %v752 = vmul.f32 %v483, %v723
        %v753 = vmul.f32 %v484, %v723
        %v754 = vmul.f32 %v485, %v723
        %v755 = vmul.f32 %v486, %v723
        %v756 = vmul.f32 %v487, %v723
        %v757 = vmul.f32 %v488, %v723
        %v758 = vmul.f32 %v489, %v723
        %v759 = vmul.f32 %v490, %v723
        %v760 = vmul.f32 %v491, %v723
        %v761 = vmul.f32 %v492, %v723
        %v762 = vmul.f32 %v493, %v723
        %v763 = vmul.f32 %v494, %v723
        %v764 = vmul.f32 %v495, %v723
        %v765 = vmul.f32 %v496, %v723
        %v766 = vmul.f32 %v497, %v723
        %v767 = vmul.f32 %v498, %v723
        %v768 = vmul.f32 %v499, %v723
        %v769 = vmul.f32 %v500, %v723
        %v770 = vmul.f32 %v501, %v723
        %v771 = vmul.f32 %v502, %v723
        %v772 = vmul.f32 %v503, %v723
        %v773 = vmul.f32 %v504, %v723
        %v774 = vmul.f32 %v505, %v723
        %v775 = vmul.f32 %v506, %v723
        %v776 = vmul.f32 %v507, %v723
        %v777 = vmul.f32 %v508, %v723
        %v778 = vmul.f32 %v509, %v723
        %v779 = vmul.f32 %v510, %v723
        %v780 = vmul.f32 %v511, %v723
        %v781 = vmul.f32 %v512, %v723
        %v782 = vmul.f32 %v513, %v723
        %v783 = vmul.f32 %v514, %v723
        %v784 = vmul.f32 %v515, %v723
        %v785 = vmul.f32 %v516, %v723
        %v786 = vmul.f32 %v517, %v723
        %v787 = vmul.f32 %v518, %v723
        %v788 = vadd.f32 %v656, %v724
        %v789 = vadd.f32 %v657, %v725
        %v790 = vadd.f32 %v658, %v726
        %v791 = vadd.f32 %v659, %v727
        %v792 = vadd.f32 %v660, %v728
        %v793 = vadd.f32 %v661, %v729
        %v794 = vadd.f32 %v662, %v730
        %v795 = vadd.f32 %v663, %v731
        %v796 = vadd.f32 %v664, %v732
        %v797 = vadd.f32 %v665, %v733
        %v798 = vadd.f32 %v666, %v734
        %v799 = vadd.f32 %v667, %v735
        %v800 = vadd.f32 %v668, %v736
        %v801 = vadd.f32 %v669, %v737
        %v802 = vadd.f32 %v670, %v738
        %v803 = vadd.f32 %v671, %v739
        %v804 = vadd.f32 %v672, %v740
        %v805 = vadd.f32 %v673, %v741
        %v806 = vadd.f32 %v674, %v742
        %v807 = vadd.f32 %v675, %v743
        %v808 = vadd.f32 %v676, %v744
        %v809 = vadd.f32 %v677, %v745
        %v810 = vadd.f32 %v678, %v746
        %v811 = vadd.f32 %v679, %v747
        %v812 = vadd.f32 %v680, %v748
        %v813 = vadd.f32 %v681, %v749
        %v814 = vadd.f32 %v682, %v750
        %v815 = vadd.f32 %v683, %v751
        %v816 = vadd.f32 %v684, %v752
        %v817 = vadd.f32 %v685, %v753
        %v818 = vadd.f32 %v686, %v754
        %v819 = vadd.f32 %v687, %v755
        %v820 = vadd.f32 %v688, %v756
        %v821 = vadd.f32 %v689, %v757
        %v822 = vadd.f32 %v690, %v758
        %v823 = vadd.f32 %v691, %v759
        %v824 = vadd.f32 %v692, %v760
        %v825 = vadd.f32 %v693, %v761
        %v826 = vadd.f32 %v694, %v762
        %v827 = vadd.f32 %v695, %v763
        %v828 = vadd.f32 %v696, %v764
        %v829 = vadd.f32 %v697, %v765
        %v830 = vadd.f32 %v698, %v766
        %v831 = vadd.f32 %v699, %v767
        %v832 = vadd.f32 %v700, %v768
        %v833 = vadd.f32 %v701, %v769
        %v834 = vadd.f32 %v702, %v770
        %v835 = vadd.f32 %v703, %v771
        %v836 = vadd.f32 %v704, %v772
        %v837 = vadd.f32 %v705, %v773
        %v838 = vadd.f32 %v706, %v774
        %v839 = vadd.f32 %v707, %v775
        %v840 = vadd.f32 %v708, %v776
        %v841 = vadd.f32 %v709, %v777
        %v842 = vadd.f32 %v710, %v778
        %v843 = vadd.f32 %v711, %v779
        %v844 = vadd.f32 %v712, %v780
        %v845 = vadd.f32 %v713, %v781
        %v846 = vadd.f32 %v714, %v782
        %v847 = vadd.f32 %v715, %v783
        %v848 = vadd.f32 %v716, %v784
        %v849 = vadd.f32 %v717, %v785
        %v850 = vadd.f32 %v718, %v786
        %v851 = vadd.f32 %v719, %v787
        %852 = vadd.xlane.f32.xlu0 %v788
        %v853 = vpop.xlane.xlu0 %852
        %854 = vadd.xlane.f32.xlu0 %v789
        %v855 = vpop.xlane.xlu0 %854
        %856 = vadd.xlane.f32.xlu0 %v790
        %v857 = vpop.xlane.xlu0 %856
        %858 = vadd.xlane.f32.xlu0 %v791
        %v859 = vpop.xlane.xlu0 %858
        %860 = vadd.xlane.f32.xlu0 %v792
        %v861 = vpop.xlane.xlu0 %860
        %862 = vadd.xlane.f32.xlu0 %v793
        %v863 = vpop.xlane.xlu0 %862
        %864 = vadd.xlane.f32.xlu0 %v794
        %v865 = vpop.xlane.xlu0 %864
        %866 = vadd.xlane.f32.xlu0 %v795
        %v867 = vpop.xlane.xlu0 %866
        %868 = vadd.xlane.f32.xlu0 %v796
        %v869 = vpop.xlane.xlu0 %868
        %870 = vadd.xlane.f32.xlu0 %v797
        %v871 = vpop.xlane.xlu0 %870
        %872 = vadd.xlane.f32.xlu0 %v798
        %v873 = vpop.xlane.xlu0 %872
        %874 = vadd.xlane.f32.xlu0 %v799
        %v875 = vpop.xlane.xlu0 %874
        %876 = vadd.xlane.f32.xlu0 %v800
        %v877 = vpop.xlane.xlu0 %876
        %878 = vadd.xlane.f32.xlu0 %v801
        %v879 = vpop.xlane.xlu0 %878
        %880 = vadd.xlane.f32.xlu0 %v802
        %v881 = vpop.xlane.xlu0 %880
        %882 = vadd.xlane.f32.xlu0 %v803
        %v883 = vpop.xlane.xlu0 %882
        %884 = vadd.xlane.f32.xlu0 %v804
        %v885 = vpop.xlane.xlu0 %884
        %886 = vadd.xlane.f32.xlu0 %v805
        %v887 = vpop.xlane.xlu0 %886
        %888 = vadd.xlane.f32.xlu0 %v806
        %v889 = vpop.xlane.xlu0 %888
        %890 = vadd.xlane.f32.xlu0 %v807
        %v891 = vpop.xlane.xlu0 %890
        %892 = vadd.xlane.f32.xlu0 %v808
        %v893 = vpop.xlane.xlu0 %892
        %894 = vadd.xlane.f32.xlu0 %v809
        %v895 = vpop.xlane.xlu0 %894
        %896 = vadd.xlane.f32.xlu0 %v810
        %v897 = vpop.xlane.xlu0 %896
        %898 = vadd.xlane.f32.xlu0 %v811
        %v899 = vpop.xlane.xlu0 %898
        %900 = vadd.xlane.f32.xlu0 %v812
        %v901 = vpop.xlane.xlu0 %900
        %902 = vadd.xlane.f32.xlu0 %v813
        %v903 = vpop.xlane.xlu0 %902
        %904 = vadd.xlane.f32.xlu0 %v814
        %v905 = vpop.xlane.xlu0 %904
        %906 = vadd.xlane.f32.xlu0 %v815
        %v907 = vpop.xlane.xlu0 %906
        %908 = vadd.xlane.f32.xlu0 %v816
        %v909 = vpop.xlane.xlu0 %908
        %910 = vadd.xlane.f32.xlu0 %v817
        %v911 = vpop.xlane.xlu0 %910
        %912 = vadd.xlane.f32.xlu0 %v818
        %v913 = vpop.xlane.xlu0 %912
        %914 = vadd.xlane.f32.xlu0 %v819
        %v915 = vpop.xlane.xlu0 %914
        %916 = vadd.xlane.f32.xlu0 %v820
        %v917 = vpop.xlane.xlu0 %916
        %918 = vadd.xlane.f32.xlu0 %v821
        %v919 = vpop.xlane.xlu0 %918
        %920 = vadd.xlane.f32.xlu0 %v822
        %v921 = vpop.xlane.xlu0 %920
        %922 = vadd.xlane.f32.xlu0 %v823
        %v923 = vpop.xlane.xlu0 %922
        %924 = vadd.xlane.f32.xlu0 %v824
        %v925 = vpop.xlane.xlu0 %924
        %926 = vadd.xlane.f32.xlu0 %v825
        %v927 = vpop.xlane.xlu0 %926
        %928 = vadd.xlane.f32.xlu0 %v826
        %v929 = vpop.xlane.xlu0 %928
        %930 = vadd.xlane.f32.xlu0 %v827
        %v931 = vpop.xlane.xlu0 %930
        %932 = vadd.xlane.f32.xlu0 %v828
        %v933 = vpop.xlane.xlu0 %932
        %934 = vadd.xlane.f32.xlu0 %v829
        %v935 = vpop.xlane.xlu0 %934
        %936 = vadd.xlane.f32.xlu0 %v830
        %v937 = vpop.xlane.xlu0 %936
        %938 = vadd.xlane.f32.xlu0 %v831
        %v939 = vpop.xlane.xlu0 %938
        %940 = vadd.xlane.f32.xlu0 %v832
        %v941 = vpop.xlane.xlu0 %940
        %942 = vadd.xlane.f32.xlu0 %v833
        %v943 = vpop.xlane.xlu0 %942
        %944 = vadd.xlane.f32.xlu0 %v834
        %v945 = vpop.xlane.xlu0 %944
        %946 = vadd.xlane.f32.xlu0 %v835
        %v947 = vpop.xlane.xlu0 %946
        %948 = vadd.xlane.f32.xlu0 %v836
        %v949 = vpop.xlane.xlu0 %948
        %950 = vadd.xlane.f32.xlu0 %v837
        %v951 = vpop.xlane.xlu0 %950
        %952 = vadd.xlane.f32.xlu0 %v838
        %v953 = vpop.xlane.xlu0 %952
        %954 = vadd.xlane.f32.xlu0 %v839
        %v955 = vpop.xlane.xlu0 %954
        %956 = vadd.xlane.f32.xlu0 %v840
        %v957 = vpop.xlane.xlu0 %956
        %958 = vadd.xlane.f32.xlu0 %v841
        %v959 = vpop.xlane.xlu0 %958
        %960 = vadd.xlane.f32.xlu0 %v842
        %v961 = vpop.xlane.xlu0 %960
        %962 = vadd.xlane.f32.xlu0 %v843
        %v963 = vpop.xlane.xlu0 %962
        %964 = vadd.xlane.f32.xlu0 %v844
        %v965 = vpop.xlane.xlu0 %964
        %966 = vadd.xlane.f32.xlu0 %v845
        %v967 = vpop.xlane.xlu0 %966
        %968 = vadd.xlane.f32.xlu0 %v846
        %v969 = vpop.xlane.xlu0 %968
        %970 = vadd.xlane.f32.xlu0 %v847
        %v971 = vpop.xlane.xlu0 %970
        %972 = vadd.xlane.f32.xlu0 %v848
        %v973 = vpop.xlane.xlu0 %972
        %974 = vadd.xlane.f32.xlu0 %v849
        %v975 = vpop.xlane.xlu0 %974
        %976 = vadd.xlane.f32.xlu0 %v850
        %v977 = vpop.xlane.xlu0 %976
        %978 = vadd.xlane.f32.xlu0 %v851
        %v979 = vpop.xlane.xlu0 %978
        %s980 = sld [smem:[#allocation2]]
        %v981 = vstv %s980
        %v982 = vadd.f32 %v853, %v981
        %v983 = vadd.f32 %v855, %v981
        %v984 = vadd.f32 %v857, %v981
        %v985 = vadd.f32 %v859, %v981
        %v986 = vadd.f32 %v861, %v981
        %v987 = vadd.f32 %v863, %v981
        %v988 = vadd.f32 %v865, %v981
        %v989 = vadd.f32 %v867, %v981
        %v990 = vadd.f32 %v869, %v981
        %v991 = vadd.f32 %v871, %v981
        %v992 = vadd.f32 %v873, %v981
        %v993 = vadd.f32 %v875, %v981
        %v994 = vadd.f32 %v877, %v981
        %v995 = vadd.f32 %v879, %v981
        %v996 = vadd.f32 %v881, %v981
        %v997 = vadd.f32 %v883, %v981
        %v998 = vadd.f32 %v885, %v981
        %v999 = vadd.f32 %v887, %v981
        %v1000 = vadd.f32 %v889, %v981
        %v1001 = vadd.f32 %v891, %v981
        %v1002 = vadd.f32 %v893, %v981
        %v1003 = vadd.f32 %v895, %v981
        %v1004 = vadd.f32 %v897, %v981
        %v1005 = vadd.f32 %v899, %v981
        %v1006 = vadd.f32 %v901, %v981
        %v1007 = vadd.f32 %v903, %v981
        %v1008 = vadd.f32 %v905, %v981
        %v1009 = vadd.f32 %v907, %v981
        %v1010 = vadd.f32 %v909, %v981
        %v1011 = vadd.f32 %v911, %v981
        %v1012 = vadd.f32 %v913, %v981
        %v1013 = vadd.f32 %v915, %v981
        %v1014 = vadd.f32 %v917, %v981
        %v1015 = vadd.f32 %v919, %v981
        %v1016 = vadd.f32 %v921, %v981
        %v1017 = vadd.f32 %v923, %v981
        %v1018 = vadd.f32 %v925, %v981
        %v1019 = vadd.f32 %v927, %v981
        %v1020 = vadd.f32 %v929, %v981
        %v1021 = vadd.f32 %v931, %v981
        %v1022 = vadd.f32 %v933, %v981
        %v1023 = vadd.f32 %v935, %v981
        %v1024 = vadd.f32 %v937, %v981
        %v1025 = vadd.f32 %v939, %v981
        %v1026 = vadd.f32 %v941, %v981
        %v1027 = vadd.f32 %v943, %v981
        %v1028 = vadd.f32 %v945, %v981
        %v1029 = vadd.f32 %v947, %v981
        %v1030 = vadd.f32 %v949, %v981
        %v1031 = vadd.f32 %v951, %v981
        %v1032 = vadd.f32 %v953, %v981
        %v1033 = vadd.f32 %v955, %v981
        %v1034 = vadd.f32 %v957, %v981
        %v1035 = vadd.f32 %v959, %v981
        %v1036 = vadd.f32 %v961, %v981
        %v1037 = vadd.f32 %v963, %v981
        %v1038 = vadd.f32 %v965, %v981
        %v1039 = vadd.f32 %v967, %v981
        %v1040 = vadd.f32 %v969, %v981
        %v1041 = vadd.f32 %v971, %v981
        %v1042 = vadd.f32 %v973, %v981
        %v1043 = vadd.f32 %v975, %v981
        %v1044 = vadd.f32 %v977, %v981
        %v1045 = vadd.f32 %v979, %v981
        %v1046 = vxor.u32 %v982, 2147483648
        %v1047 = vxor.u32 %v983, 2147483648
        %v1048 = vxor.u32 %v984, 2147483648
        %v1049 = vxor.u32 %v985, 2147483648
        %v1050 = vxor.u32 %v986, 2147483648
        %v1051 = vxor.u32 %v987, 2147483648
        %v1052 = vxor.u32 %v988, 2147483648
        %v1053 = vxor.u32 %v989, 2147483648
        %v1054 = vxor.u32 %v990, 2147483648
        %v1055 = vxor.u32 %v991, 2147483648
        %v1056 = vxor.u32 %v992, 2147483648
        %v1057 = vxor.u32 %v993, 2147483648
        %v1058 = vxor.u32 %v994, 2147483648
        %v1059 = vxor.u32 %v995, 2147483648
        %v1060 = vxor.u32 %v996, 2147483648
        %v1061 = vxor.u32 %v997, 2147483648
        %v1062 = vxor.u32 %v998, 2147483648
        %v1063 = vxor.u32 %v999, 2147483648
        %v1064 = vxor.u32 %v1000, 2147483648
        %v1065 = vxor.u32 %v1001, 2147483648
        %v1066 = vxor.u32 %v1002, 2147483648
        %v1067 = vxor.u32 %v1003, 2147483648
        %v1068 = vxor.u32 %v1004, 2147483648
        %v1069 = vxor.u32 %v1005, 2147483648
        %v1070 = vxor.u32 %v1006, 2147483648
        %v1071 = vxor.u32 %v1007, 2147483648
        %v1072 = vxor.u32 %v1008, 2147483648
        %v1073 = vxor.u32 %v1009, 2147483648
        %v1074 = vxor.u32 %v1010, 2147483648
        %v1075 = vxor.u32 %v1011, 2147483648
        %v1076 = vxor.u32 %v1012, 2147483648
        %v1077 = vxor.u32 %v1013, 2147483648
        %v1078 = vxor.u32 %v1014, 2147483648
        %v1079 = vxor.u32 %v1015, 2147483648
        %v1080 = vxor.u32 %v1016, 2147483648
        %v1081 = vxor.u32 %v1017, 2147483648
        %v1082 = vxor.u32 %v1018, 2147483648
        %v1083 = vxor.u32 %v1019, 2147483648
        %v1084 = vxor.u32 %v1020, 2147483648
        %v1085 = vxor.u32 %v1021, 2147483648
        %v1086 = vxor.u32 %v1022, 2147483648
        %v1087 = vxor.u32 %v1023, 2147483648
        %v1088 = vxor.u32 %v1024, 2147483648
        %v1089 = vxor.u32 %v1025, 2147483648
        %v1090 = vxor.u32 %v1026, 2147483648
        %v1091 = vxor.u32 %v1027, 2147483648
        %v1092 = vxor.u32 %v1028, 2147483648
        %v1093 = vxor.u32 %v1029, 2147483648
        %v1094 = vxor.u32 %v1030, 2147483648
        %v1095 = vxor.u32 %v1031, 2147483648
        %v1096 = vxor.u32 %v1032, 2147483648
        %v1097 = vxor.u32 %v1033, 2147483648
        %v1098 = vxor.u32 %v1034, 2147483648
        %v1099 = vxor.u32 %v1035, 2147483648
        %v1100 = vxor.u32 %v1036, 2147483648
        %v1101 = vxor.u32 %v1037, 2147483648
        %v1102 = vxor.u32 %v1038, 2147483648
        %v1103 = vxor.u32 %v1039, 2147483648
        %v1104 = vxor.u32 %v1040, 2147483648
        %v1105 = vxor.u32 %v1041, 2147483648
        %v1106 = vxor.u32 %v1042, 2147483648
        %v1107 = vxor.u32 %v1043, 2147483648
        %v1108 = vxor.u32 %v1044, 2147483648
        %v1109 = vxor.u32 %v1045, 2147483648
        %v1110 = vmul.f32 %v1046, 1.442695
        %v1111 = vpow.pop %v1110
        %v1112 = vmul.f32 %v1047, 1.442695
        %v1113 = vpow.pop %v1112
        %v1114 = vmul.f32 %v1048, 1.442695
        %v1115 = vpow.pop %v1114
        %v1116 = vmul.f32 %v1049, 1.442695
        %v1117 = vpow.pop %v1116
        %v1118 = vmul.f32 %v1050, 1.442695
        %v1119 = vpow.pop %v1118
        %v1120 = vmul.f32 %v1051, 1.442695
        %v1121 = vpow.pop %v1120
        %v1122 = vmul.f32 %v1052, 1.442695
        %v1123 = vpow.pop %v1122
        %v1124 = vmul.f32 %v1053, 1.442695
        %v1125 = vpow.pop %v1124
        %v1126 = vmul.f32 %v1054, 1.442695
        %v1127 = vpow.pop %v1126
        %v1128 = vmul.f32 %v1055, 1.442695
        %v1129 = vpow.pop %v1128
        %v1130 = vmul.f32 %v1056, 1.442695
        %v1131 = vpow.pop %v1130
        %v1132 = vmul.f32 %v1057, 1.442695
        %v1133 = vpow.pop %v1132
        %v1134 = vmul.f32 %v1058, 1.442695
        %v1135 = vpow.pop %v1134
        %v1136 = vmul.f32 %v1059, 1.442695
        %v1137 = vpow.pop %v1136
        %v1138 = vmul.f32 %v1060, 1.442695
        %v1139 = vpow.pop %v1138
        %v1140 = vmul.f32 %v1061, 1.442695
        %v1141 = vpow.pop %v1140
        %v1142 = vmul.f32 %v1062, 1.442695
        %v1143 = vpow.pop %v1142
        %v1144 = vmul.f32 %v1063, 1.442695
        %v1145 = vpow.pop %v1144
        %v1146 = vmul.f32 %v1064, 1.442695
        %v1147 = vpow.pop %v1146
        %v1148 = vmul.f32 %v1065, 1.442695
        %v1149 = vpow.pop %v1148
        %v1150 = vmul.f32 %v1066, 1.442695
        %v1151 = vpow.pop %v1150
        %v1152 = vmul.f32 %v1067, 1.442695
        %v1153 = vpow.pop %v1152
        %v1154 = vmul.f32 %v1068, 1.442695
        %v1155 = vpow.pop %v1154
        %v1156 = vmul.f32 %v1069, 1.442695
        %v1157 = vpow.pop %v1156
        %v1158 = vmul.f32 %v1070, 1.442695
        %v1159 = vpow.pop %v1158
        %v1160 = vmul.f32 %v1071, 1.442695
        %v1161 = vpow.pop %v1160
        %v1162 = vmul.f32 %v1072, 1.442695
        %v1163 = vpow.pop %v1162
        %v1164 = vmul.f32 %v1073, 1.442695
        %v1165 = vpow.pop %v1164
        %v1166 = vmul.f32 %v1074, 1.442695
        %v1167 = vpow.pop %v1166
        %v1168 = vmul.f32 %v1075, 1.442695
        %v1169 = vpow.pop %v1168
        %v1170 = vmul.f32 %v1076, 1.442695
        %v1171 = vpow.pop %v1170
        %v1172 = vmul.f32 %v1077, 1.442695
        %v1173 = vpow.pop %v1172
        %v1174 = vmul.f32 %v1078, 1.442695
        %v1175 = vpow.pop %v1174
        %v1176 = vmul.f32 %v1079, 1.442695
        %v1177 = vpow.pop %v1176
        %v1178 = vmul.f32 %v1080, 1.442695
        %v1179 = vpow.pop %v1178
        %v1180 = vmul.f32 %v1081, 1.442695
        %v1181 = vpow.pop %v1180
        %v1182 = vmul.f32 %v1082, 1.442695
        %v1183 = vpow.pop %v1182
        %v1184 = vmul.f32 %v1083, 1.442695
        %v1185 = vpow.pop %v1184
        %v1186 = vmul.f32 %v1084, 1.442695
        %v1187 = vpow.pop %v1186
        %v1188 = vmul.f32 %v1085, 1.442695
        %v1189 = vpow.pop %v1188
        %v1190 = vmul.f32 %v1086, 1.442695
        %v1191 = vpow.pop %v1190
        %v1192 = vmul.f32 %v1087, 1.442695
        %v1193 = vpow.pop %v1192
        %v1194 = vmul.f32 %v1088, 1.442695
        %v1195 = vpow.pop %v1194
        %v1196 = vmul.f32 %v1089, 1.442695
        %v1197 = vpow.pop %v1196
        %v1198 = vmul.f32 %v1090, 1.442695
        %v1199 = vpow.pop %v1198
        %v1200 = vmul.f32 %v1091, 1.442695
        %v1201 = vpow.pop %v1200
        %v1202 = vmul.f32 %v1092, 1.442695
        %v1203 = vpow.pop %v1202
        %v1204 = vmul.f32 %v1093, 1.442695
        %v1205 = vpow.pop %v1204
        %v1206 = vmul.f32 %v1094, 1.442695
        %v1207 = vpow.pop %v1206
        %v1208 = vmul.f32 %v1095, 1.442695
        %v1209 = vpow.pop %v1208
        %v1210 = vmul.f32 %v1096, 1.442695
        %v1211 = vpow.pop %v1210
        %v1212 = vmul.f32 %v1097, 1.442695
        %v1213 = vpow.pop %v1212
        %v1214 = vmul.f32 %v1098, 1.442695
        %v1215 = vpow.pop %v1214
        %v1216 = vmul.f32 %v1099, 1.442695
        %v1217 = vpow.pop %v1216
        %v1218 = vmul.f32 %v1100, 1.442695
        %v1219 = vpow.pop %v1218
        %v1220 = vmul.f32 %v1101, 1.442695
        %v1221 = vpow.pop %v1220
        %v1222 = vmul.f32 %v1102, 1.442695
        %v1223 = vpow.pop %v1222
        %v1224 = vmul.f32 %v1103, 1.442695
        %v1225 = vpow.pop %v1224
        %v1226 = vmul.f32 %v1104, 1.442695
        %v1227 = vpow.pop %v1226
        %v1228 = vmul.f32 %v1105, 1.442695
        %v1229 = vpow.pop %v1228
        %v1230 = vmul.f32 %v1106, 1.442695
        %v1231 = vpow.pop %v1230
        %v1232 = vmul.f32 %v1107, 1.442695
        %v1233 = vpow.pop %v1232
        %v1234 = vmul.f32 %v1108, 1.442695
        %v1235 = vpow.pop %v1234
        %v1236 = vmul.f32 %v1109, 1.442695
        %v1237 = vpow.pop %v1236
        %v1238 = vadd.f32 %v1111, 1.0
        %v1239 = vadd.f32 %v1113, 1.0
        %v1240 = vadd.f32 %v1115, 1.0
        %v1241 = vadd.f32 %v1117, 1.0
        %v1242 = vadd.f32 %v1119, 1.0
        %v1243 = vadd.f32 %v1121, 1.0
        %v1244 = vadd.f32 %v1123, 1.0
        %v1245 = vadd.f32 %v1125, 1.0
        %v1246 = vadd.f32 %v1127, 1.0
        %v1247 = vadd.f32 %v1129, 1.0
        %v1248 = vadd.f32 %v1131, 1.0
        %v1249 = vadd.f32 %v1133, 1.0
        %v1250 = vadd.f32 %v1135, 1.0
        %v1251 = vadd.f32 %v1137, 1.0
        %v1252 = vadd.f32 %v1139, 1.0
        %v1253 = vadd.f32 %v1141, 1.0
        %v1254 = vadd.f32 %v1143, 1.0
        %v1255 = vadd.f32 %v1145, 1.0
        %v1256 = vadd.f32 %v1147, 1.0
        %v1257 = vadd.f32 %v1149, 1.0
        %v1258 = vadd.f32 %v1151, 1.0
        %v1259 = vadd.f32 %v1153, 1.0
        %v1260 = vadd.f32 %v1155, 1.0
        %v1261 = vadd.f32 %v1157, 1.0
        %v1262 = vadd.f32 %v1159, 1.0
        %v1263 = vadd.f32 %v1161, 1.0
        %v1264 = vadd.f32 %v1163, 1.0
        %v1265 = vadd.f32 %v1165, 1.0
        %v1266 = vadd.f32 %v1167, 1.0
        %v1267 = vadd.f32 %v1169, 1.0
        %v1268 = vadd.f32 %v1171, 1.0
        %v1269 = vadd.f32 %v1173, 1.0
        %v1270 = vadd.f32 %v1175, 1.0
        %v1271 = vadd.f32 %v1177, 1.0
        %v1272 = vadd.f32 %v1179, 1.0
        %v1273 = vadd.f32 %v1181, 1.0
        %v1274 = vadd.f32 %v1183, 1.0
        %v1275 = vadd.f32 %v1185, 1.0
        %v1276 = vadd.f32 %v1187, 1.0
        %v1277 = vadd.f32 %v1189, 1.0
        %v1278 = vadd.f32 %v1191, 1.0
        %v1279 = vadd.f32 %v1193, 1.0
        %v1280 = vadd.f32 %v1195, 1.0
        %v1281 = vadd.f32 %v1197, 1.0
        %v1282 = vadd.f32 %v1199, 1.0
        %v1283 = vadd.f32 %v1201, 1.0
        %v1284 = vadd.f32 %v1203, 1.0
        %v1285 = vadd.f32 %v1205, 1.0
        %v1286 = vadd.f32 %v1207, 1.0
        %v1287 = vadd.f32 %v1209, 1.0
        %v1288 = vadd.f32 %v1211, 1.0
        %v1289 = vadd.f32 %v1213, 1.0
        %v1290 = vadd.f32 %v1215, 1.0
        %v1291 = vadd.f32 %v1217, 1.0
        %v1292 = vadd.f32 %v1219, 1.0
        %v1293 = vadd.f32 %v1221, 1.0
        %v1294 = vadd.f32 %v1223, 1.0
        %v1295 = vadd.f32 %v1225, 1.0
        %v1296 = vadd.f32 %v1227, 1.0
        %v1297 = vadd.f32 %v1229, 1.0
        %v1298 = vadd.f32 %v1231, 1.0
        %v1299 = vadd.f32 %v1233, 1.0
        %v1300 = vadd.f32 %v1235, 1.0
        %v1301 = vadd.f32 %v1237, 1.0
        %v1302 = vrcp.pop %v1238
        %v1303 = vmul.f32 1.0, %v1302
        %v1304 = vrcp.pop %v1239
        %v1305 = vmul.f32 1.0, %v1304
        %v1306 = vrcp.pop %v1240
        %v1307 = vmul.f32 1.0, %v1306
        %v1308 = vrcp.pop %v1241
        %v1309 = vmul.f32 1.0, %v1308
        %v1310 = vrcp.pop %v1242
        %v1311 = vmul.f32 1.0, %v1310
        %v1312 = vrcp.pop %v1243
        %v1313 = vmul.f32 1.0, %v1312
        %v1314 = vrcp.pop %v1244
        %v1315 = vmul.f32 1.0, %v1314
        %v1316 = vrcp.pop %v1245
        %v1317 = vmul.f32 1.0, %v1316
        %v1318 = vrcp.pop %v1246
        %v1319 = vmul.f32 1.0, %v1318
        %v1320 = vrcp.pop %v1247
        %v1321 = vmul.f32 1.0, %v1320
        %v1322 = vrcp.pop %v1248
        %v1323 = vmul.f32 1.0, %v1322
        %v1324 = vrcp.pop %v1249
        %v1325 = vmul.f32 1.0, %v1324
        %v1326 = vrcp.pop %v1250
        %v1327 = vmul.f32 1.0, %v1326
        %v1328 = vrcp.pop %v1251
        %v1329 = vmul.f32 1.0, %v1328
        %v1330 = vrcp.pop %v1252
        %v1331 = vmul.f32 1.0, %v1330
        %v1332 = vrcp.pop %v1253
        %v1333 = vmul.f32 1.0, %v1332
        %v1334 = vrcp.pop %v1254
        %v1335 = vmul.f32 1.0, %v1334
        %v1336 = vrcp.pop %v1255
        %v1337 = vmul.f32 1.0, %v1336
        %v1338 = vrcp.pop %v1256
        %v1339 = vmul.f32 1.0, %v1338
        %v1340 = vrcp.pop %v1257
        %v1341 = vmul.f32 1.0, %v1340
        %v1342 = vrcp.pop %v1258
        %v1343 = vmul.f32 1.0, %v1342
        %v1344 = vrcp.pop %v1259
        %v1345 = vmul.f32 1.0, %v1344
        %v1346 = vrcp.pop %v1260
        %v1347 = vmul.f32 1.0, %v1346
        %v1348 = vrcp.pop %v1261
        %v1349 = vmul.f32 1.0, %v1348
        %v1350 = vrcp.pop %v1262
        %v1351 = vmul.f32 1.0, %v1350
        %v1352 = vrcp.pop %v1263
        %v1353 = vmul.f32 1.0, %v1352
        %v1354 = vrcp.pop %v1264
        %v1355 = vmul.f32 1.0, %v1354
        %v1356 = vrcp.pop %v1265
        %v1357 = vmul.f32 1.0, %v1356
        %v1358 = vrcp.pop %v1266
        %v1359 = vmul.f32 1.0, %v1358
        %v1360 = vrcp.pop %v1267
        %v1361 = vmul.f32 1.0, %v1360
        %v1362 = vrcp.pop %v1268
        %v1363 = vmul.f32 1.0, %v1362
        %v1364 = vrcp.pop %v1269
        %v1365 = vmul.f32 1.0, %v1364
        %v1366 = vrcp.pop %v1270
        %v1367 = vmul.f32 1.0, %v1366
        %v1368 = vrcp.pop %v1271
        %v1369 = vmul.f32 1.0, %v1368
        %v1370 = vrcp.pop %v1272
        %v1371 = vmul.f32 1.0, %v1370
        %v1372 = vrcp.pop %v1273
        %v1373 = vmul.f32 1.0, %v1372
        %v1374 = vrcp.pop %v1274
        %v1375 = vmul.f32 1.0, %v1374
        %v1376 = vrcp.pop %v1275
        %v1377 = vmul.f32 1.0, %v1376
        %v1378 = vrcp.pop %v1276
        %v1379 = vmul.f32 1.0, %v1378
        %v1380 = vrcp.pop %v1277
        %v1381 = vmul.f32 1.0, %v1380
        %v1382 = vrcp.pop %v1278
        %v1383 = vmul.f32 1.0, %v1382
        %v1384 = vrcp.pop %v1279
        %v1385 = vmul.f32 1.0, %v1384
        %v1386 = vrcp.pop %v1280
        %v1387 = vmul.f32 1.0, %v1386
        %v1388 = vrcp.pop %v1281
        %v1389 = vmul.f32 1.0, %v1388
        %v1390 = vrcp.pop %v1282
        %v1391 = vmul.f32 1.0, %v1390
        %v1392 = vrcp.pop %v1283
        %v1393 = vmul.f32 1.0, %v1392
        %v1394 = vrcp.pop %v1284
        %v1395 = vmul.f32 1.0, %v1394
        %v1396 = vrcp.pop %v1285
        %v1397 = vmul.f32 1.0, %v1396
        %v1398 = vrcp.pop %v1286
        %v1399 = vmul.f32 1.0, %v1398
        %v1400 = vrcp.pop %v1287
        %v1401 = vmul.f32 1.0, %v1400
        %v1402 = vrcp.pop %v1288
        %v1403 = vmul.f32 1.0, %v1402
        %v1404 = vrcp.pop %v1289
        %v1405 = vmul.f32 1.0, %v1404
        %v1406 = vrcp.pop %v1290
        %v1407 = vmul.f32 1.0, %v1406
        %v1408 = vrcp.pop %v1291
        %v1409 = vmul.f32 1.0, %v1408
        %v1410 = vrcp.pop %v1292
        %v1411 = vmul.f32 1.0, %v1410
        %v1412 = vrcp.pop %v1293
        %v1413 = vmul.f32 1.0, %v1412
        %v1414 = vrcp.pop %v1294
        %v1415 = vmul.f32 1.0, %v1414
        %v1416 = vrcp.pop %v1295
        %v1417 = vmul.f32 1.0, %v1416
        %v1418 = vrcp.pop %v1296
        %v1419 = vmul.f32 1.0, %v1418
        %v1420 = vrcp.pop %v1297
        %v1421 = vmul.f32 1.0, %v1420
        %v1422 = vrcp.pop %v1298
        %v1423 = vmul.f32 1.0, %v1422
        %v1424 = vrcp.pop %v1299
        %v1425 = vmul.f32 1.0, %v1424
        %v1426 = vrcp.pop %v1300
        %v1427 = vmul.f32 1.0, %v1426
        %v1428 = vrcp.pop %v1301
        %v1429 = vmul.f32 1.0, %v1428
        %vm1430 = vcmask 7168
        %1431 = vst.msk [vmem:[%s325] sm:$0xff] %vm1430, %v1303
        %1432 = vst.msk [vmem:[%s325 + $0x8] sm:$0xff] %vm1430, %v1305
        %1433 = vst.msk [vmem:[%s325 + $0x10] sm:$0xff] %vm1430, %v1307
        %1434 = vst.msk [vmem:[%s325 + $0x18] sm:$0xff] %vm1430, %v1309
        %1435 = vst.msk [vmem:[%s325 + $0x20] sm:$0xff] %vm1430, %v1311
        %1436 = vst.msk [vmem:[%s325 + $0x28] sm:$0xff] %vm1430, %v1313
        %1437 = vst.msk [vmem:[%s325 + $0x30] sm:$0xff] %vm1430, %v1315
        %1438 = vst.msk [vmem:[%s325 + $0x38] sm:$0xff] %vm1430, %v1317
        %1439 = vst.msk [vmem:[%s325 + $0x40] sm:$0xff] %vm1430, %v1319
        %1440 = vst.msk [vmem:[%s325 + $0x48] sm:$0xff] %vm1430, %v1321
        %1441 = vst.msk [vmem:[%s325 + $0x50] sm:$0xff] %vm1430, %v1323
        %1442 = vst.msk [vmem:[%s325 + $0x58] sm:$0xff] %vm1430, %v1325
        %1443 = vst.msk [vmem:[%s325 + $0x60] sm:$0xff] %vm1430, %v1327
        %1444 = vst.msk [vmem:[%s325 + $0x68] sm:$0xff] %vm1430, %v1329
        %1445 = vst.msk [vmem:[%s325 + $0x70] sm:$0xff] %vm1430, %v1331
        %1446 = vst.msk [vmem:[%s325 + $0x78] sm:$0xff] %vm1430, %v1333
        %1447 = vst.msk [vmem:[%s325 + $0x80] sm:$0xff] %vm1430, %v1335
        %1448 = vst.msk [vmem:[%s325 + $0x88] sm:$0xff] %vm1430, %v1337
        %1449 = vst.msk [vmem:[%s325 + $0x90] sm:$0xff] %vm1430, %v1339
        %1450 = vst.msk [vmem:[%s325 + $0x98] sm:$0xff] %vm1430, %v1341
        %1451 = vst.msk [vmem:[%s325 + $0xa0] sm:$0xff] %vm1430, %v1343
        %1452 = vst.msk [vmem:[%s325 + $0xa8] sm:$0xff] %vm1430, %v1345
        %1453 = vst.msk [vmem:[%s325 + $0xb0] sm:$0xff] %vm1430, %v1347
        %1454 = vst.msk [vmem:[%s325 + $0xb8] sm:$0xff] %vm1430, %v1349
        %1455 = vst.msk [vmem:[%s325 + $0xc0] sm:$0xff] %vm1430, %v1351
        %1456 = vst.msk [vmem:[%s325 + $0xc8] sm:$0xff] %vm1430, %v1353
        %1457 = vst.msk [vmem:[%s325 + $0xd0] sm:$0xff] %vm1430, %v1355
        %1458 = vst.msk [vmem:[%s325 + $0xd8] sm:$0xff] %vm1430, %v1357
        %1459 = vst.msk [vmem:[%s325 + $0xe0] sm:$0xff] %vm1430, %v1359
        %1460 = vst.msk [vmem:[%s325 + $0xe8] sm:$0xff] %vm1430, %v1361
        %1461 = vst.msk [vmem:[%s325 + $0xf0] sm:$0xff] %vm1430, %v1363
        %1462 = vst.msk [vmem:[%s325 + $0xf8] sm:$0xff] %vm1430, %v1365
        %1463 = vst.msk [vmem:[%s325 + $0x100] sm:$0xff] %vm1430, %v1367
        %1464 = vst.msk [vmem:[%s325 + $0x108] sm:$0xff] %vm1430, %v1369
        %1465 = vst.msk [vmem:[%s325 + $0x110] sm:$0xff] %vm1430, %v1371
        %1466 = vst.msk [vmem:[%s325 + $0x118] sm:$0xff] %vm1430, %v1373
        %1467 = vst.msk [vmem:[%s325 + $0x120] sm:$0xff] %vm1430, %v1375
        %1468 = vst.msk [vmem:[%s325 + $0x128] sm:$0xff] %vm1430, %v1377
        %1469 = vst.msk [vmem:[%s325 + $0x130] sm:$0xff] %vm1430, %v1379
        %1470 = vst.msk [vmem:[%s325 + $0x138] sm:$0xff] %vm1430, %v1381
        %1471 = vst.msk [vmem:[%s325 + $0x140] sm:$0xff] %vm1430, %v1383
        %1472 = vst.msk [vmem:[%s325 + $0x148] sm:$0xff] %vm1430, %v1385
        %1473 = vst.msk [vmem:[%s325 + $0x150] sm:$0xff] %vm1430, %v1387
        %1474 = vst.msk [vmem:[%s325 + $0x158] sm:$0xff] %vm1430, %v1389
        %1475 = vst.msk [vmem:[%s325 + $0x160] sm:$0xff] %vm1430, %v1391
        %1476 = vst.msk [vmem:[%s325 + $0x168] sm:$0xff] %vm1430, %v1393
        %1477 = vst.msk [vmem:[%s325 + $0x170] sm:$0xff] %vm1430, %v1395
        %1478 = vst.msk [vmem:[%s325 + $0x178] sm:$0xff] %vm1430, %v1397
        %1479 = vst.msk [vmem:[%s325 + $0x180] sm:$0xff] %vm1430, %v1399
        %1480 = vst.msk [vmem:[%s325 + $0x188] sm:$0xff] %vm1430, %v1401
        %1481 = vst.msk [vmem:[%s325 + $0x190] sm:$0xff] %vm1430, %v1403
        %1482 = vst.msk [vmem:[%s325 + $0x198] sm:$0xff] %vm1430, %v1405
        %1483 = vst.msk [vmem:[%s325 + $0x1a0] sm:$0xff] %vm1430, %v1407
        %1484 = vst.msk [vmem:[%s325 + $0x1a8] sm:$0xff] %vm1430, %v1409
        %1485 = vst.msk [vmem:[%s325 + $0x1b0] sm:$0xff] %vm1430, %v1411
        %1486 = vst.msk [vmem:[%s325 + $0x1b8] sm:$0xff] %vm1430, %v1413
        %1487 = vst.msk [vmem:[%s325 + $0x1c0] sm:$0xff] %vm1430, %v1415
        %1488 = vst.msk [vmem:[%s325 + $0x1c8] sm:$0xff] %vm1430, %v1417
        %1489 = vst.msk [vmem:[%s325 + $0x1d0] sm:$0xff] %vm1430, %v1419
        %1490 = vst.msk [vmem:[%s325 + $0x1d8] sm:$0xff] %vm1430, %v1421
        %1491 = vst.msk [vmem:[%s325 + $0x1e0] sm:$0xff] %vm1430, %v1423
        %1492 = vst.msk [vmem:[%s325 + $0x1e8] sm:$0xff] %vm1430, %v1425
        %1493 = vst.msk [vmem:[%s325 + $0x1f0] sm:$0xff] %vm1430, %v1427
        %1494 = vst.msk [vmem:[%s325 + $0x1f8] sm:$0xff] %vm1430, %v1429
        %s1495 = smul.u32 64, %s23
        %p1496 = scmp.lt.s32.totalorder %s1495, 127
        %s1497 = scalar_select %p1496, %s1495, 127
        %s1498 = smul.addr %s1497, 8
        %s1499 = scalar_lea.vmem %s5, %s1498
        // Predicated region
        $region53: #{tpu_custom_call.1} parent=39 // pred_check
          %p1500 = pneg %p161
        $region54: #{tpu_custom_call.1} parent=39 // pred_check_branch
          %1502 = sbr.rel (%p1500) target = $region56
        $region55: #{tpu_custom_call.1} parent=39 // pred_region
          %s1503 = smul.u32 64, %s23
        $region56: #{tpu_custom_call.1} parent=39 // pred_fallthru
          _
      $region40: #{tpu_custom_call.1} parent=5 // pred_fallthru
        _
      %p1504 = scmp.le.s32.totalorder 2, %s18
      // Predicated region
      $region57: #{tpu_custom_call.1} parent=5 // pred_check
        %p1505 = pneg %p1504
      $region58: #{tpu_custom_call.1} parent=5 // pred_check_branch
        %1507 = sbr.rel (%p1505) target = $region60
      $region59: #{tpu_custom_call.1} parent=5 // pred_region
        %s1508 = ssub.s32 %s18, 2
        // Predicated region
        $region61: #{tpu_custom_call.1} parent=59 // pred_check
          %p1509 = pneg %p167
        $region62: #{tpu_custom_call.1} parent=59 // pred_check_branch
          %1511 = sbr.rel (%p1509) target = $region64
        $region63: #{tpu_custom_call.1} parent=59 // pred_region
          %s1512 = smul.u32 64, %s24
          %p1513 = scmp.lt.s32.totalorder %s1512, 127
          %s1514 = scalar_select %p1513, %s1512, 127
          %s1515 = smul.addr %s1514, 8
          %s1516 = scalar_lea.vmem %s5, %s1515
        $region64: #{tpu_custom_call.1} parent=59 // pred_fallthru
          _
      $region60: #{tpu_custom_call.1} parent=5 // pred_fallthru
        _
    $region6: #{tpu_custom_call.1} parent=1 // loop_footer
      %s22 = sadd.s32 1, %s18
    $region7: #{tpu_custom_call.1} parent=1 // loop_footer_branch
      %17 = sbr.rel target = $region3
    $region8: #{tpu_custom_call.1} parent=1 // loop_exit
      _
    %1517 = vsyncpa [#allocation4], 1
    %s1518 = scalar_lea.sflag [#allocation4], 1
    %1519 = vsyncpa %s1518, 1
    %1520 = vsyncpa [#allocation6], 1
    %s1521 = scalar_lea.sflag [#allocation6], 1
    %1522 = vsyncpa %s1521, 1

</llo_original>
